<compile_context>
chip_gen: v7x
topology: tpu7x:2x2x1
jax: 0.10.0
libtpu: 0.0.40
codegen_flags: <defaults>
</compile_context>

<pallas_src>
import functools

import jax
import jax.numpy as jnp
from jax.experimental import pallas as pl
from jax.experimental.pallas import tpu as pltpu

_VMEM_LIMIT = 40 * 1024 * 1024   # scoped-VMEM limit; leaves headroom on v7x (64 MiB)


def _pick_tile(n, target):
    """Largest tile <= target dividing n; prefer %16 (bf16 sublane packing), then %8."""
    if n <= target:
        return n
    best = None
    for t in range(target, 0, -1):
        if n % t == 0:
            if t % 16 == 0:
                return t
            if best is None and t % 8 == 0:
                best = t
    return best if best is not None else n


# -----------------------------------------------------------------------------
# Kernel A: LayerNorm + Q / fused-KV projection into head-major layout.
# -----------------------------------------------------------------------------
def _ln_qkv_kernel(x_ref, gamma_ref, wq_ref, wkv_ref, q_ref, kv_ref, *, heads, eps):
    x = x_ref[0].astype(jnp.float32)                       # (tn, dim)
    g = gamma_ref[...].astype(jnp.float32)                 # (1, dim)

    # LayerNorm over the feature dim (beta == 0); elementwise math kept in f32.
    mean = jnp.mean(x, axis=-1, keepdims=True)
    var = jnp.mean(jnp.square(x - mean), axis=-1, keepdims=True)
    xn = ((x - mean) * jax.lax.rsqrt(var + eps) * g).astype(wq_ref.dtype)

    # Per-head weights indexed along the (major) head axis -> no lane slicing.
    # K and V are fused per head into one (dim, 2*dim_head) matmul: 128-lane-dense
    # stores for dim_head=64, half the matmul count of separate K/V projections.
    for h in range(heads):
        q_ref[0, h] = jnp.dot(xn, wq_ref[h],
                              preferred_element_type=jnp.float32).astype(q_ref.dtype)
        kv_ref[0, h] = jnp.dot(xn, wkv_ref[h],
                               preferred_element_type=jnp.float32).astype(kv_ref.dtype)


# -----------------------------------------------------------------------------
# Kernel B: flash attention (online softmax) + fused output projection.
# -----------------------------------------------------------------------------
def _flash_attn_kernel(q_ref, kv_ref, wo_ref, o_ref,
                       m_sc, l_sc, acc_sc, cat_sc,
                       *, tq, tkv, heads, dim_head, causal):
    iq = pl.program_id(1)
    ikv = pl.program_id(2)
    neg_big = -jnp.finfo(jnp.float32).max

    @pl.when(ikv == 0)
    def _init():
        m_sc[...] = jnp.full_like(m_sc, -jnp.inf)
        l_sc[...] = jnp.zeros_like(l_sc)
        acc_sc[...] = jnp.zeros_like(acc_sc)

    def _compute():
        q = q_ref[0]                                       # (heads, tq,  d)
        kv = kv_ref[0]                                     # (heads, tkv, 2d)  [K | V]
        k = kv[:, :, :dim_head]
        v = kv[:, :, dim_head:]

        # Heads batched into one dot_general -> contiguous MXU pushes,
        # contraction on the lane dim (no explicit transpose of k).
        s = jnp.einsum('hqd,hkd->hqk', q, k,
                       preferred_element_type=jnp.float32)  # (heads, tq, tkv) f32

        if causal:
            row = iq * tq + jax.lax.broadcasted_iota(jnp.int32, (tq, tkv), 0)
            col = ikv * tkv + jax.lax.broadcasted_iota(jnp.int32, (tq, tkv), 1)
            s = jnp.where((col > row)[None, :, :], neg_big, s)

        m_prev = m_sc[...]
        m_new = jnp.maximum(m_prev, s.max(axis=-1, keepdims=True))
        alpha = jnp.exp(m_prev - m_new)
        # exp runs in the compute dtype (bf16 EUP path on v6e/v7x); m/l/acc stay f32.
        p = jnp.exp((s - m_new).astype(kv.dtype))
        l_sc[...] = alpha * l_sc[...] + jnp.sum(p, axis=-1, keepdims=True,
                                                dtype=jnp.float32)
        acc_sc[...] = alpha * acc_sc[...] + jnp.einsum(
            'hqk,hkd->hqd', p, v, preferred_element_type=jnp.float32)
        m_sc[...] = m_new

    if causal:
        # Skip KV tiles lying entirely above the diagonal (~half the FLOPs).
        @pl.when(ikv * tkv < (iq + 1) * tq)
        def _maybe():
            _compute()
    else:
        _compute()

    @pl.when(ikv == pl.num_programs(2) - 1)
    def _finalize():
        inv_l = pl.reciprocal(l_sc[...], approx=True)        # (heads, tq, 1)
        out_h = (acc_sc[...] * inv_l).astype(cat_sc.dtype)   # (heads, tq, d)
        # Stage the head-concatenated activation in VMEM scratch (independent
        # per-head stores, no loop-carried (tq, dim) f32 value -> no vreg spills),
        # then one long-K matmul against Wo; the output store is lane-dense in dim.
        for h in range(heads):
            cat_sc[:, h * dim_head:(h + 1) * dim_head] = out_h[h]
        o_ref[0] = jnp.dot(cat_sc[...], wo_ref[...],
                           preferred_element_type=jnp.float32).astype(o_ref.dtype)


# -----------------------------------------------------------------------------
# Wrapper
# -----------------------------------------------------------------------------
@functools.partial(jax.jit,
                   static_argnames=("heads", "dim_head", "causal",
                                    "block_q", "block_kv", "block_n",
                                    "compute_dtype"))
def attention_forward(x, gamma, wq, wkv, wo, *, heads, dim_head,
                      causal=False, block_q=None, block_kv=None, block_n=None,
                      compute_dtype=jnp.bfloat16):
    """Pallas TPU forward pass of musiclm Attention (mask=None, dropout=0)."""
    b, n, dim = x.shape
    inner = heads * dim_head
    scale = dim_head ** -0.5
    out_dtype = x.dtype

    tn = block_n or _pick_tile(n, 512)
    tq = block_q or _pick_tile(n, 256)
    tkv = block_kv or _pick_tile(n, 256)
    assert n % tn == 0 and n % tq == 0 and n % tkv == 0

    # Host-side (trace-time) weight preprocessing:
    #  * softmax scale folded into Wq,
    #  * K/V weights fused per head -> (heads, dim, 2*dim_head),
    #  * everything cast to the (bf16 by default) compute dtype for MXU feeds;
    #    matmuls always accumulate in f32.
    wq_h = (wq * scale).reshape(dim, heads, dim_head).transpose(1, 0, 2)
    wk_h = wkv[:, :inner].reshape(dim, heads, dim_head)
    wv_h = wkv[:, inner:].reshape(dim, heads, dim_head)
    wkv_h = jnp.concatenate([wk_h, wv_h], axis=-1).transpose(1, 0, 2)
    wq_h = wq_h.astype(compute_dtype)
    wkv_h = wkv_h.astype(compute_dtype)
    wo_c = wo.astype(compute_dtype)                       # (inner, dim), row order = (h d)
    gamma2d = gamma.reshape(1, dim).astype(jnp.float32)
    x_c = x.astype(compute_dtype)

    # ---- Kernel A: LayerNorm + Q / fused-KV projection -----------------------
    q, kv = pl.pallas_call(
        functools.partial(_ln_qkv_kernel, heads=heads, eps=1e-5),
        out_shape=(
            jax.ShapeDtypeStruct((b, heads, n, dim_head), compute_dtype),
            jax.ShapeDtypeStruct((b, heads, n, 2 * dim_head), compute_dtype),
        ),
        grid_spec=pltpu.PrefetchScalarGridSpec(
            num_scalar_prefetch=0,
            grid=(b, n // tn),
            in_specs=[
                pl.BlockSpec((1, tn, dim), lambda ib, it: (ib, it, 0)),
                pl.BlockSpec((1, dim), lambda ib, it: (0, 0)),
                pl.BlockSpec((heads, dim, dim_head), lambda ib, it: (0, 0, 0)),
                pl.BlockSpec((heads, dim, 2 * dim_head), lambda ib, it: (0, 0, 0)),
            ],
            out_specs=[
                pl.BlockSpec((1, heads, tn, dim_head), lambda ib, it: (ib, 0, it, 0)),
                pl.BlockSpec((1, heads, tn, 2 * dim_head), lambda ib, it: (ib, 0, it, 0)),
            ],
        ),
        compiler_params=pltpu.CompilerParams(
            dimension_semantics=("parallel", "parallel"),
            vmem_limit_bytes=_VMEM_LIMIT),
    )(x_c, gamma2d, wq_h, wkv_h)

    # ---- Kernel B: flash attention + fused output projection -----------------
    if causal:
        # Fully-masked (above-diagonal) steps keep the last valid KV block
        # resident instead of DMA-ing a tile whose compute is skipped.
        def kv_index_map(ib, iq, ikv):
            last = ((iq + 1) * tq - 1) // tkv
            return (ib, 0, jnp.minimum(ikv, last), 0)
    else:
        def kv_index_map(ib, iq, ikv):
            return (ib, 0, ikv, 0)

    y = pl.pallas_call(
        functools.partial(_flash_attn_kernel, tq=tq, tkv=tkv,
                          heads=heads, dim_head=dim_head, causal=causal),
        out_shape=jax.ShapeDtypeStruct((b, n, dim), out_dtype),
        grid_spec=pltpu.PrefetchScalarGridSpec(
            num_scalar_prefetch=0,
            grid=(b, n // tq, n // tkv),
            in_specs=[
                pl.BlockSpec((1, heads, tq, dim_head),
                             lambda ib, iq, ikv: (ib, 0, iq, 0)),
                pl.BlockSpec((1, heads, tkv, 2 * dim_head), kv_index_map),
                pl.BlockSpec((inner, dim), lambda ib, iq, ikv: (0, 0)),
            ],
            out_specs=pl.BlockSpec((1, tq, dim),
                                   lambda ib, iq, ikv: (ib, iq, 0)),
            scratch_shapes=[
                pltpu.VMEM((heads, tq, 1), jnp.float32),         # running max m
                pltpu.VMEM((heads, tq, 1), jnp.float32),         # running sum l
                pltpu.VMEM((heads, tq, dim_head), jnp.float32),  # PV accumulator
                pltpu.VMEM((tq, inner), compute_dtype),          # head-concat staging
            ],
        ),
        compiler_params=pltpu.CompilerParams(
            dimension_semantics=("parallel", "parallel", "arbitrary"),
            vmem_limit_bytes=_VMEM_LIMIT),
    )(q, kv, wo_c)

    return y


# -----------------------------------------------------------------------------
# Pure-JAX reference mirroring the PyTorch forward (mask=None, dropout=0).
# -----------------------------------------------------------------------------
def attention_reference(x, gamma, wq, wkv, wo, *, heads, dim_head, causal=False):
    b, n, dim = x.shape
    inner = heads * dim_head
    scale = dim_head ** -0.5

    mean = jnp.mean(x, axis=-1, keepdims=True)
    var = jnp.mean(jnp.square(x - mean), axis=-1, keepdims=True)
    xn = (x - mean) / jnp.sqrt(var + 1e-5) * gamma

    q = xn @ wq
    kv = xn @ wkv
    k, v = kv[..., :inner], kv[..., inner:]

    def split_heads(t):
        return t.reshape(b, n, heads, dim_head).transpose(0, 2, 1, 3)

    q, k, v = map(split_heads, (q, k, v))
    q = q * scale
    sim = jnp.einsum('bhid,bhjd->bhij', q, k)
    if causal:
        mask = jnp.triu(jnp.ones((n, n), dtype=bool), k=1)
        sim = jnp.where(mask, -jnp.finfo(sim.dtype).max, sim)
    attn = jax.nn.softmax(sim, axis=-1)
    out = jnp.einsum('bhij,bhjd->bhid', attn, v)
    out = out.transpose(0, 2, 1, 3).reshape(b, n, inner)
    return out @ wo


if __name__ == "__main__":
    # TODO(synk): the optional key-padding `mask` argument and nonzero dropout
    # are not implemented (defaults mask=None, dropout=0.0 are identity paths).

    def _run_case(batch, seq, dim, heads, dim_head, causal, key,
                  compute_dtype=jnp.bfloat16, tol=3e-2, **tile_kw):
        inner = heads * dim_head
        kx, kq, kkv, ko = jax.random.split(key, 4)
        x = jax.random.normal(kx, (batch, seq, dim), dtype=jnp.float32)
        gamma = jnp.ones((dim,), dtype=jnp.float32)
        wq = jax.random.normal(kq, (dim, inner), dtype=jnp.float32) * 0.05
        wkv = jax.random.normal(kkv, (dim, 2 * inner), dtype=jnp.float32) * 0.05
        wo = jax.random.normal(ko, (inner, dim), dtype=jnp.float32) * 0.05

        out = attention_forward(x, gamma, wq, wkv, wo, heads=heads,
                                dim_head=dim_head, causal=causal,
                                compute_dtype=compute_dtype, **tile_kw)
        out = jax.block_until_ready(out)

        # Reference sees the same quantized inputs as the kernel (math in f32).
        cx, cq, ckv, co = (t.astype(compute_dtype).astype(jnp.float32)
                           for t in (x, wq, wkv, wo))
        ref = attention_reference(cx, gamma, cq, ckv, co, heads=heads,
                                  dim_head=dim_head, causal=causal)
        assert out.shape == (batch, seq, dim)
        err = float(jnp.max(jnp.abs(out.astype(jnp.float32) - ref)))
        assert jnp.allclose(out.astype(jnp.float32), ref, atol=tol, rtol=tol), err

    key = jax.random.PRNGKey(0)
    k1, k2, k3, k4 = jax.random.split(key, 4)

    # Small shapes (module defaults scaled down); f32 path checked tightly.
    _run_case(2, 16, 32, 2, 64, False, k1, compute_dtype=jnp.float32, tol=2e-3)
    _run_case(2, 16, 32, 2, 64, True, k2)
    # Multi-tile cases exercising online softmax across KV tiles, the causal
    # compute skip and the clamped causal K/V DMA.
    _run_case(1, 256, 128, 4, 64, True, k3, block_q=128, block_kv=128, block_n=128)
    _run_case(1, 256, 128, 4, 64, False, k4, block_q=128, block_kv=128, block_n=128)

    print("KERNEL_OK")
</pallas_src>

<mosaic_0001>
module attributes {stable_mosaic.version = 11 : i64} {
  func.func @_ln_qkv_kernel(%arg0: i32, %arg1: i32, %arg2: memref<1x16x32xf32, #tpu.memory_space<vmem>>, %arg3: memref<1x32xf32, #tpu.memory_space<vmem>>, %arg4: memref<2x32x64xf32, #tpu.memory_space<vmem>>, %arg5: memref<2x32x128xf32, #tpu.memory_space<vmem>>, %arg6: memref<1x2x16x64xf32, #tpu.memory_space<vmem>>, %arg7: memref<1x2x16x128xf32, #tpu.memory_space<vmem>>) attributes {dimension_semantics = [#tpu.dimension_semantics<parallel>, #tpu.dimension_semantics<parallel>], iteration_bounds = array<i64: 2, 1>, scalar_prefetch = 0 : i64, scratch_operands = 0 : i64, tpu.core_type = #tpu.core_type<tc>, window_params = [{transform_indices = @transform_0, window_bounds = array<i64: 1, 16, 32>}, {pipeline_mode = #tpu.pipeline_mode<synchronous>, transform_indices = @transform_1, window_bounds = array<i64: 1, 32>}, {pipeline_mode = #tpu.pipeline_mode<synchronous>, transform_indices = @transform_2, window_bounds = array<i64: 2, 32, 64>}, {pipeline_mode = #tpu.pipeline_mode<synchronous>, transform_indices = @transform_3, window_bounds = array<i64: 2, 32, 128>}, {transform_indices = @transform_4, window_bounds = array<i64: 1, 2, 16, 64>}, {transform_indices = @transform_5, window_bounds = array<i64: 1, 2, 16, 128>}]} {
    %c0 = arith.constant 0 : index
    %c0_0 = arith.constant 0 : index
    %c0_1 = arith.constant 0 : index
    %0 = vector.load %arg2[%c0, %c0_0, %c0_1] : memref<1x16x32xf32, #tpu.memory_space<vmem>>, vector<1x16x32xf32>
    %1 = vector.shape_cast %0 : vector<1x16x32xf32> to vector<16x32xf32>
    %c0_2 = arith.constant 0 : index
    %c0_3 = arith.constant 0 : index
    %2 = vector.load %arg3[%c0_2, %c0_3] : memref<1x32xf32, #tpu.memory_space<vmem>>, vector<1x32xf32>
    %cst = arith.constant dense<0.000000e+00> : vector<16xf32>
    %3 = vector.multi_reduction <add>, %1, %cst [1] : vector<16x32xf32> to vector<16xf32>
    %4 = vector.shape_cast %3 : vector<16xf32> to vector<16x1xf32>
    %cst_4 = arith.constant 3.200000e+01 : f32
    %5 = vector.broadcast %cst_4 : f32 to vector<16x1xf32>
    %6 = arith.divf %4, %5 : vector<16x1xf32>
    %7 = vector.broadcast %6 : vector<16x1xf32> to vector<16x32xf32>
    %8 = arith.subf %1, %7 : vector<16x32xf32>
    %9 = arith.mulf %8, %8 : vector<16x32xf32>
    %cst_5 = arith.constant dense<0.000000e+00> : vector<16xf32>
    %10 = vector.multi_reduction <add>, %9, %cst_5 [1] : vector<16x32xf32> to vector<16xf32>
    %11 = vector.shape_cast %10 : vector<16xf32> to vector<16x1xf32>
    %cst_6 = arith.constant 3.200000e+01 : f32
    %12 = vector.broadcast %cst_6 : f32 to vector<16x1xf32>
    %13 = arith.divf %11, %12 : vector<16x1xf32>
    %14 = vector.broadcast %6 : vector<16x1xf32> to vector<16x32xf32>
    %15 = arith.subf %1, %14 : vector<16x32xf32>
    %cst_7 = arith.constant 9.99999974E-6 : f32
    %16 = vector.broadcast %cst_7 : f32 to vector<16x1xf32>
    %17 = arith.addf %13, %16 : vector<16x1xf32>
    %18 = math.rsqrt %17 : vector<16x1xf32>
    %19 = vector.broadcast %18 : vector<16x1xf32> to vector<16x32xf32>
    %20 = arith.mulf %15, %19 : vector<16x32xf32>
    %21 = vector.broadcast %2 : vector<1x32xf32> to vector<16x32xf32>
    %22 = arith.mulf %20, %21 : vector<16x32xf32>
    %c0_8 = arith.constant 0 : index
    %c0_9 = arith.constant 0 : index
    %c0_10 = arith.constant 0 : index
    %23 = vector.load %arg4[%c0_8, %c0_9, %c0_10] : memref<2x32x64xf32, #tpu.memory_space<vmem>>, vector<1x32x64xf32>
    %24 = vector.shape_cast %23 : vector<1x32x64xf32> to vector<32x64xf32>
    %cst_11 = arith.constant dense<0.000000e+00> : vector<16x64xf32>
    %25 = tpu.matmul %22, %24, %cst_11 {dimension_numbers = #tpu.dot_dimension_numbers<[1], [0], [0], [1], [0, 0, 1, 1], [], []>} : vector<16x32xf32>, vector<32x64xf32>, vector<16x64xf32> -> vector<16x64xf32>
    %c0_12 = arith.constant 0 : index
    %c0_13 = arith.constant 0 : index
    %c0_14 = arith.constant 0 : index
    %c0_15 = arith.constant 0 : index
    %26 = vector.load %arg6[%c0_12, %c0_13, %c0_14, %c0_15] : memref<1x2x16x64xf32, #tpu.memory_space<vmem>>, vector<1x1x16x64xf32>
    %27 = vector.shape_cast %26 : vector<1x1x16x64xf32> to vector<16x64xf32>
    %28 = vector.shape_cast %25 : vector<16x64xf32> to vector<1x1x16x64xf32>
    tpu.vector_store %arg6[%c0_12, %c0_13, %c0_14, %c0_15], %28 {strides = array<i32>} : memref<1x2x16x64xf32, #tpu.memory_space<vmem>>, vector<1x1x16x64xf32>,
    %c0_16 = arith.constant 0 : index
    %c0_17 = arith.constant 0 : index
    %c0_18 = arith.constant 0 : index
    %29 = vector.load %arg5[%c0_16, %c0_17, %c0_18] : memref<2x32x128xf32, #tpu.memory_space<vmem>>, vector<1x32x128xf32>
    %30 = vector.shape_cast %29 : vector<1x32x128xf32> to vector<32x128xf32>
    %cst_19 = arith.constant dense<0.000000e+00> : vector<16x128xf32>
    %31 = tpu.matmul %22, %30, %cst_19 {dimension_numbers = #tpu.dot_dimension_numbers<[1], [0], [0], [1], [0, 0, 1, 1], [], []>} : vector<16x32xf32>, vector<32x128xf32>, vector<16x128xf32> -> vector<16x128xf32>
    %c0_20 = arith.constant 0 : index
    %c0_21 = arith.constant 0 : index
    %c0_22 = arith.constant 0 : index
    %c0_23 = arith.constant 0 : index
    %32 = vector.load %arg7[%c0_20, %c0_21, %c0_22, %c0_23] : memref<1x2x16x128xf32, #tpu.memory_space<vmem>>, vector<1x1x16x128xf32>
    %33 = vector.shape_cast %32 : vector<1x1x16x128xf32> to vector<16x128xf32>
    %34 = vector.shape_cast %31 : vector<16x128xf32> to vector<1x1x16x128xf32>
    tpu.vector_store %arg7[%c0_20, %c0_21, %c0_22, %c0_23], %34 {strides = array<i32>} : memref<1x2x16x128xf32, #tpu.memory_space<vmem>>, vector<1x1x16x128xf32>,
    %c1 = arith.constant 1 : index
    %c0_24 = arith.constant 0 : index
    %c0_25 = arith.constant 0 : index
    %35 = vector.load %arg4[%c1, %c0_24, %c0_25] : memref<2x32x64xf32, #tpu.memory_space<vmem>>, vector<1x32x64xf32>
    %36 = vector.shape_cast %35 : vector<1x32x64xf32> to vector<32x64xf32>
    %cst_26 = arith.constant dense<0.000000e+00> : vector<16x64xf32>
    %37 = tpu.matmul %22, %36, %cst_26 {dimension_numbers = #tpu.dot_dimension_numbers<[1], [0], [0], [1], [0, 0, 1, 1], [], []>} : vector<16x32xf32>, vector<32x64xf32>, vector<16x64xf32> -> vector<16x64xf32>
    %c0_27 = arith.constant 0 : index
    %c1_28 = arith.constant 1 : index
    %c0_29 = arith.constant 0 : index
    %c0_30 = arith.constant 0 : index
    %38 = vector.load %arg6[%c0_27, %c1_28, %c0_29, %c0_30] : memref<1x2x16x64xf32, #tpu.memory_space<vmem>>, vector<1x1x16x64xf32>
    %39 = vector.shape_cast %38 : vector<1x1x16x64xf32> to vector<16x64xf32>
    %40 = vector.shape_cast %37 : vector<16x64xf32> to vector<1x1x16x64xf32>
    tpu.vector_store %arg6[%c0_27, %c1_28, %c0_29, %c0_30], %40 {strides = array<i32>} : memref<1x2x16x64xf32, #tpu.memory_space<vmem>>, vector<1x1x16x64xf32>,
    %c1_31 = arith.constant 1 : index
    %c0_32 = arith.constant 0 : index
    %c0_33 = arith.constant 0 : index
    %41 = vector.load %arg5[%c1_31, %c0_32, %c0_33] : memref<2x32x128xf32, #tpu.memory_space<vmem>>, vector<1x32x128xf32>
    %42 = vector.shape_cast %41 : vector<1x32x128xf32> to vector<32x128xf32>
    %cst_34 = arith.constant dense<0.000000e+00> : vector<16x128xf32>
    %43 = tpu.matmul %22, %42, %cst_34 {dimension_numbers = #tpu.dot_dimension_numbers<[1], [0], [0], [1], [0, 0, 1, 1], [], []>} : vector<16x32xf32>, vector<32x128xf32>, vector<16x128xf32> -> vector<16x128xf32>
    %c0_35 = arith.constant 0 : index
    %c1_36 = arith.constant 1 : index
    %c0_37 = arith.constant 0 : index
    %c0_38 = arith.constant 0 : index
    %44 = vector.load %arg7[%c0_35, %c1_36, %c0_37, %c0_38] : memref<1x2x16x128xf32, #tpu.memory_space<vmem>>, vector<1x1x16x128xf32>
    %45 = vector.shape_cast %44 : vector<1x1x16x128xf32> to vector<16x128xf32>
    %46 = vector.shape_cast %43 : vector<16x128xf32> to vector<1x1x16x128xf32>
    tpu.vector_store %arg7[%c0_35, %c1_36, %c0_37, %c0_38], %46 {strides = array<i32>} : memref<1x2x16x128xf32, #tpu.memory_space<vmem>>, vector<1x1x16x128xf32>,
    return
  }
  func.func @transform_0(%arg0: i32, %arg1: i32) -> (i32, i32, i32) {
    %c0_i32 = arith.constant 0 : i32
    %c0_i32_0 = arith.constant 0 : i32
    return %arg0, %arg1, %c0_i32 : i32, i32, i32
  }
  func.func @transform_1(%arg0: i32, %arg1: i32) -> (i32, i32) {
    %c0_i32 = arith.constant 0 : i32
    %c0_i32_0 = arith.constant 0 : i32
    %c0_i32_1 = arith.constant 0 : i32
    return %c0_i32, %c0_i32_0 : i32, i32
  }
  func.func @transform_2(%arg0: i32, %arg1: i32) -> (i32, i32, i32) {
    %c0_i32 = arith.constant 0 : i32
    %c0_i32_0 = arith.constant 0 : i32
    %c0_i32_1 = arith.constant 0 : i32
    %c0_i32_2 = arith.constant 0 : i32
    return %c0_i32, %c0_i32_0, %c0_i32_1 : i32, i32, i32
  }
  func.func @transform_3(%arg0: i32, %arg1: i32) -> (i32, i32, i32) {
    %c0_i32 = arith.constant 0 : i32
    %c0_i32_0 = arith.constant 0 : i32
    %c0_i32_1 = arith.constant 0 : i32
    %c0_i32_2 = arith.constant 0 : i32
    return %c0_i32, %c0_i32_0, %c0_i32_1 : i32, i32, i32
  }
  func.func @transform_4(%arg0: i32, %arg1: i32) -> (i32, i32, i32, i32) {
    %c0_i32 = arith.constant 0 : i32
    %c0_i32_0 = arith.constant 0 : i32
    %c0_i32_1 = arith.constant 0 : i32
    return %arg0, %c0_i32, %arg1, %c0_i32_0 : i32, i32, i32, i32
  }
  func.func @transform_5(%arg0: i32, %arg1: i32) -> (i32, i32, i32, i32) {
    %c0_i32 = arith.constant 0 : i32
    %c0_i32_0 = arith.constant 0 : i32
    %c0_i32_1 = arith.constant 0 : i32
    return %arg0, %c0_i32, %arg1, %c0_i32_0 : i32, i32, i32, i32
  }
}

module attributes {stable_mosaic.version = 11 : i64} {
  func.func @_flash_attn_kernel(%arg0: i32, %arg1: i32, %arg2: i32, %arg3: memref<1x2x16x64xf32, #tpu.memory_space<vmem>>, %arg4: memref<1x2x16x128xf32, #tpu.memory_space<vmem>>, %arg5: memref<128x32xf32, #tpu.memory_space<vmem>>, %arg6: memref<1x16x32xf32, #tpu.memory_space<vmem>>, %arg7: memref<2x16x1xf32, #tpu.memory_space<vmem>>, %arg8: memref<2x16x1xf32, #tpu.memory_space<vmem>>, %arg9: memref<2x16x64xf32, #tpu.memory_space<vmem>>, %arg10: memref<16x128xf32, #tpu.memory_space<vmem>>) attributes {dimension_semantics = [#tpu.dimension_semantics<parallel>, #tpu.dimension_semantics<parallel>, #tpu.dimension_semantics<arbitrary>], iteration_bounds = array<i64: 2, 1, 1>, scalar_prefetch = 0 : i64, scratch_operands = 4 : i64, tpu.core_type = #tpu.core_type<tc>, window_params = [{transform_indices = @transform_0, window_bounds = array<i64: 1, 2, 16, 64>}, {transform_indices = @transform_1, window_bounds = array<i64: 1, 2, 16, 128>}, {pipeline_mode = #tpu.pipeline_mode<synchronous>, transform_indices = @transform_2, window_bounds = array<i64: 128, 32>}, {transform_indices = @transform_3, window_bounds = array<i64: 1, 16, 32>}]} {
    %c0_i32 = arith.constant 0 : i32
    %0 = arith.cmpi eq, %arg2, %c0_i32 : i32
    %1 = arith.extui %0 : i1 to i32
    %c0_i32_0 = arith.constant 0 : i32
    %2 = arith.cmpi ne, %1, %c0_i32_0 : i32
    scf.if %2 {
      %cst_31 = arith.constant 0xFF800000 : f32
      %35 = vector.broadcast %cst_31 : f32 to vector<2x16x1xf32>
      %c0_32 = arith.constant 0 : index
      %c0_33 = arith.constant 0 : index
      %c0_34 = arith.constant 0 : index
      %36 = vector.load %arg7[%c0_32, %c0_33, %c0_34] : memref<2x16x1xf32, #tpu.memory_space<vmem>>, vector<2x16x1xf32>
      tpu.vector_store %arg7[%c0_32, %c0_33, %c0_34], %35 {strides = array<i32>} : memref<2x16x1xf32, #tpu.memory_space<vmem>>, vector<2x16x1xf32>,
      %cst_35 = arith.constant 0.000000e+00 : f32
      %37 = vector.broadcast %cst_35 : f32 to vector<2x16x1xf32>
      %c0_36 = arith.constant 0 : index
      %c0_37 = arith.constant 0 : index
      %c0_38 = arith.constant 0 : index
      %38 = vector.load %arg8[%c0_36, %c0_37, %c0_38] : memref<2x16x1xf32, #tpu.memory_space<vmem>>, vector<2x16x1xf32>
      tpu.vector_store %arg8[%c0_36, %c0_37, %c0_38], %37 {strides = array<i32>} : memref<2x16x1xf32, #tpu.memory_space<vmem>>, vector<2x16x1xf32>,
      %cst_39 = arith.constant 0.000000e+00 : f32
      %39 = vector.broadcast %cst_39 : f32 to vector<2x16x64xf32>
      %c0_40 = arith.constant 0 : index
      %c0_41 = arith.constant 0 : index
      %c0_42 = arith.constant 0 : index
      %40 = vector.load %arg9[%c0_40, %c0_41, %c0_42] : memref<2x16x64xf32, #tpu.memory_space<vmem>>, vector<2x16x64xf32>
      tpu.vector_store %arg9[%c0_40, %c0_41, %c0_42], %39 {strides = array<i32>} : memref<2x16x64xf32, #tpu.memory_space<vmem>>, vector<2x16x64xf32>,
    } else {
    }
    %c0 = arith.constant 0 : index
    %c0_1 = arith.constant 0 : index
    %c0_2 = arith.constant 0 : index
    %c0_3 = arith.constant 0 : index
    %3 = vector.load %arg3[%c0, %c0_1, %c0_2, %c0_3] : memref<1x2x16x64xf32, #tpu.memory_space<vmem>>, vector<1x2x16x64xf32>
    %4 = vector.shape_cast %3 : vector<1x2x16x64xf32> to vector<2x16x64xf32>
    %c0_4 = arith.constant 0 : index
    %c0_5 = arith.constant 0 : index
    %c0_6 = arith.constant 0 : index
    %c0_7 = arith.constant 0 : index
    %5 = vector.load %arg4[%c0_4, %c0_5, %c0_6, %c0_7] : memref<1x2x16x128xf32, #tpu.memory_space<vmem>>, vector<1x2x16x128xf32>
    %6 = vector.shape_cast %5 : vector<1x2x16x128xf32> to vector<2x16x128xf32>
    %7 = vector.extract_strided_slice %6 {offsets = [0, 0, 0], sizes = [2, 16, 64], strides = [1, 1, 1]} : vector<2x16x128xf32> to vector<2x16x64xf32>
    %8 = vector.extract_strided_slice %6 {offsets = [0, 0, 64], sizes = [2, 16, 64], strides = [1, 1, 1]} : vector<2x16x128xf32> to vector<2x16x64xf32>
    "tpu.trace_start"() <{level = 10 : i32, message = "hqd,hkd->hqk"}> : () -> ()
    %cst = arith.constant dense<0.000000e+00> : vector<2x16x16xf32>
    %9 = tpu.matmul %4, %7, %cst {dimension_numbers = #tpu.dot_dimension_numbers<[2], [2], [1], [1], [0, 0, 0, 1, 1, 1], [0], [0]>} : vector<2x16x64xf32>, vector<2x16x64xf32>, vector<2x16x16xf32> -> vector<2x16x16xf32>
    "tpu.trace_stop"() : () -> ()
    %c0_8 = arith.constant 0 : index
    %c0_9 = arith.constant 0 : index
    %c0_10 = arith.constant 0 : index
    %10 = vector.load %arg7[%c0_8, %c0_9, %c0_10] : memref<2x16x1xf32, #tpu.memory_space<vmem>>, vector<2x16x1xf32>
    %cst_11 = arith.constant dense<0xFF800000> : vector<2x16xf32>
    %11 = vector.multi_reduction <maximumf>, %9, %cst_11 [2] : vector<2x16x16xf32> to vector<2x16xf32>
    %12 = vector.shape_cast %11 : vector<2x16xf32> to vector<2x16x1xf32>
    %13 = arith.maximumf %10, %12 : vector<2x16x1xf32>
    %14 = arith.subf %10, %13 : vector<2x16x1xf32>
    %15 = math.exp %14 : vector<2x16x1xf32>
    %16 = vector.broadcast %13 : vector<2x16x1xf32> to vector<2x16x16xf32>
    %17 = arith.subf %9, %16 : vector<2x16x16xf32>
    %18 = math.exp %17 : vector<2x16x16xf32>
    %c0_12 = arith.constant 0 : index
    %c0_13 = arith.constant 0 : index
    %c0_14 = arith.constant 0 : index
    %19 = vector.load %arg8[%c0_12, %c0_13, %c0_14] : memref<2x16x1xf32, #tpu.memory_space<vmem>>, vector<2x16x1xf32>
    %20 = arith.mulf %15, %19 : vector<2x16x1xf32>
    %cst_15 = arith.constant dense<0.000000e+00> : vector<2x16xf32>
    %21 = vector.multi_reduction <add>, %18, %cst_15 [2] : vector<2x16x16xf32> to vector<2x16xf32>
    %22 = vector.shape_cast %21 : vector<2x16xf32> to vector<2x16x1xf32>
    %23 = arith.addf %20, %22 : vector<2x16x1xf32>
    %c0_16 = arith.constant 0 : index
    %c0_17 = arith.constant 0 : index
    %c0_18 = arith.constant 0 : index
    %24 = vector.load %arg8[%c0_16, %c0_17, %c0_18] : memref<2x16x1xf32, #tpu.memory_space<vmem>>, vector<2x16x1xf32>
    tpu.vector_store %arg8[%c0_16, %c0_17, %c0_18], %23 {strides = array<i32>} : memref<2x16x1xf32, #tpu.memory_space<vmem>>, vector<2x16x1xf32>,
    %c0_19 = arith.constant 0 : index
    %c0_20 = arith.constant 0 : index
    %c0_21 = arith.constant 0 : index
    %25 = vector.load %arg9[%c0_19, %c0_20, %c0_21] : memref<2x16x64xf32, #tpu.memory_space<vmem>>, vector<2x16x64xf32>
    %26 = vector.broadcast %15 : vector<2x16x1xf32> to vector<2x16x64xf32>
    %27 = arith.mulf %26, %25 : vector<2x16x64xf32>
    "tpu.trace_start"() <{level = 10 : i32, message = "hqk,hkd->hqd"}> : () -> ()
    %cst_22 = arith.constant dense<0.000000e+00> : vector<2x16x64xf32>
    %28 = tpu.matmul %18, %8, %cst_22 {dimension_numbers = #tpu.dot_dimension_numbers<[2], [1], [1], [2], [0, 0, 0, 1, 1, 2], [0], [0]>} : vector<2x16x16xf32>, vector<2x16x64xf32>, vector<2x16x64xf32> -> vector<2x16x64xf32>
    "tpu.trace_stop"() : () -> ()
    %29 = arith.addf %27, %28 : vector<2x16x64xf32>
    %c0_23 = arith.constant 0 : index
    %c0_24 = arith.constant 0 : index
    %c0_25 = arith.constant 0 : index
    %30 = vector.load %arg9[%c0_23, %c0_24, %c0_25] : memref<2x16x64xf32, #tpu.memory_space<vmem>>, vector<2x16x64xf32>
    tpu.vector_store %arg9[%c0_23, %c0_24, %c0_25], %29 {strides = array<i32>} : memref<2x16x64xf32, #tpu.memory_space<vmem>>, vector<2x16x64xf32>,
    %c0_26 = arith.constant 0 : index
    %c0_27 = arith.constant 0 : index
    %c0_28 = arith.constant 0 : index
    %31 = vector.load %arg7[%c0_26, %c0_27, %c0_28] : memref<2x16x1xf32, #tpu.memory_space<vmem>>, vector<2x16x1xf32>
    tpu.vector_store %arg7[%c0_26, %c0_27, %c0_28], %13 {strides = array<i32>} : memref<2x16x1xf32, #tpu.memory_space<vmem>>, vector<2x16x1xf32>,
    %c0_i32_29 = arith.constant 0 : i32
    %32 = arith.cmpi eq, %arg2, %c0_i32_29 : i32
    %33 = arith.extui %32 : i1 to i32
    %c0_i32_30 = arith.constant 0 : i32
    %34 = arith.cmpi ne, %33, %c0_i32_30 : i32
    scf.if %34 {
      %c0_31 = arith.constant 0 : index
      %c0_32 = arith.constant 0 : index
      %c0_33 = arith.constant 0 : index
      %35 = vector.load %arg8[%c0_31, %c0_32, %c0_33] : memref<2x16x1xf32, #tpu.memory_space<vmem>>, vector<2x16x1xf32>
      %36 = tpu.reciprocal %35 {approx = true} : vector<2x16x1xf32> -> vector<2x16x1xf32>
      %c0_34 = arith.constant 0 : index
      %c0_35 = arith.constant 0 : index
      %c0_36 = arith.constant 0 : index
      %37 = vector.load %arg9[%c0_34, %c0_35, %c0_36] : memref<2x16x64xf32, #tpu.memory_space<vmem>>, vector<2x16x64xf32>
      %38 = vector.broadcast %36 : vector<2x16x1xf32> to vector<2x16x64xf32>
      %39 = arith.mulf %37, %38 : vector<2x16x64xf32>
      %40 = vector.extract_strided_slice %39 {offsets = [0, 0, 0], sizes = [1, 16, 64], strides = [1, 1, 1]} : vector<2x16x64xf32> to vector<1x16x64xf32>
      %41 = vector.shape_cast %40 : vector<1x16x64xf32> to vector<16x64xf32>
      %c0_37 = arith.constant 0 : index
      %c0_38 = arith.constant 0 : index
      %42 = vector.load %arg10[%c0_37, %c0_38] : memref<16x128xf32, #tpu.memory_space<vmem>>, vector<16x64xf32>
      tpu.vector_store %arg10[%c0_37, %c0_38], %41 {strides = array<i32>} : memref<16x128xf32, #tpu.memory_space<vmem>>, vector<16x64xf32>,
      %43 = vector.extract_strided_slice %39 {offsets = [1, 0, 0], sizes = [1, 16, 64], strides = [1, 1, 1]} : vector<2x16x64xf32> to vector<1x16x64xf32>
      %44 = vector.shape_cast %43 : vector<1x16x64xf32> to vector<16x64xf32>
      %c0_39 = arith.constant 0 : index
      %c64 = arith.constant 64 : index
      %45 = vector.load %arg10[%c0_39, %c64] : memref<16x128xf32, #tpu.memory_space<vmem>>, vector<16x64xf32>
      tpu.vector_store %arg10[%c0_39, %c64], %44 {strides = array<i32>} : memref<16x128xf32, #tpu.memory_space<vmem>>, vector<16x64xf32>,
      %c0_40 = arith.constant 0 : index
      %c0_41 = arith.constant 0 : index
      %46 = vector.load %arg10[%c0_40, %c0_41] : memref<16x128xf32, #tpu.memory_space<vmem>>, vector<16x128xf32>
      %c0_42 = arith.constant 0 : index
      %c0_43 = arith.constant 0 : index
      %47 = vector.load %arg5[%c0_42, %c0_43] : memref<128x32xf32, #tpu.memory_space<vmem>>, vector<128x32xf32>
      %cst_44 = arith.constant dense<0.000000e+00> : vector<16x32xf32>
      %48 = tpu.matmul %46, %47, %cst_44 {dimension_numbers = #tpu.dot_dimension_numbers<[1], [0], [0], [1], [0, 0, 1, 1], [], []>} : vector<16x128xf32>, vector<128x32xf32>, vector<16x32xf32> -> vector<16x32xf32>
      %c0_45 = arith.constant 0 : index
      %c0_46 = arith.constant 0 : index
      %c0_47 = arith.constant 0 : index
      %49 = vector.load %arg6[%c0_45, %c0_46, %c0_47] : memref<1x16x32xf32, #tpu.memory_space<vmem>>, vector<1x16x32xf32>
      %50 = vector.shape_cast %49 : vector<1x16x32xf32> to vector<16x32xf32>
      %51 = vector.shape_cast %48 : vector<16x32xf32> to vector<1x16x32xf32>
      tpu.vector_store %arg6[%c0_45, %c0_46, %c0_47], %51 {strides = array<i32>} : memref<1x16x32xf32, #tpu.memory_space<vmem>>, vector<1x16x32xf32>,
    } else {
    }
    return
  }
  func.func @transform_0(%arg0: i32, %arg1: i32, %arg2: i32) -> (i32, i32, i32, i32) {
    %c0_i32 = arith.constant 0 : i32
    %c0_i32_0 = arith.constant 0 : i32
    %c0_i32_1 = arith.constant 0 : i32
    return %arg0, %c0_i32, %arg1, %c0_i32_0 : i32, i32, i32, i32
  }
  func.func @transform_1(%arg0: i32, %arg1: i32, %arg2: i32) -> (i32, i32, i32, i32) {
    %c0_i32 = arith.constant 0 : i32
    %c0_i32_0 = arith.constant 0 : i32
    %c0_i32_1 = arith.constant 0 : i32
    return %arg0, %c0_i32, %arg2, %c0_i32_0 : i32, i32, i32, i32
  }
  func.func @transform_2(%arg0: i32, %arg1: i32, %arg2: i32) -> (i32, i32) {
    %c0_i32 = arith.constant 0 : i32
    %c0_i32_0 = arith.constant 0 : i32
    %c0_i32_1 = arith.constant 0 : i32
    return %c0_i32, %c0_i32_0 : i32, i32
  }
  func.func @transform_3(%arg0: i32, %arg1: i32, %arg2: i32) -> (i32, i32, i32) {
    %c0_i32 = arith.constant 0 : i32
    %c0_i32_0 = arith.constant 0 : i32
    return %arg0, %arg1, %c0_i32 : i32, i32, i32
  }
}

</mosaic_0001>

<llo_original>
// kernel: attention_forward.2
$region0: #{attention_forward.2}
  #allocation0 [shape = 'u32[]', space=smem, size = 0x4, offset = 0x4, fixed_abs, tag = 'smem constant byte address 0x4 - core index']
  #allocation1 [shape = 'u32[144,128]{1,0:T(1,128)}', space=vmem, size = 0x12000, scoped, tag = 'internal scratch']
  %s0 = inlined_call_operand.vmem [shape: f32[2,16,32], index: 0, kind: input, shape index: {}]
  %s1 = inlined_call_operand.vmem [shape: f32[1,32], index: 1, kind: input, shape index: {}]
  %s2 = inlined_call_operand.vmem [shape: f32[2,32,64], index: 2, kind: input, shape index: {}]
  %s3 = inlined_call_operand.vmem [shape: f32[2,32,128], index: 3, kind: input, shape index: {}]
  %s4 = inlined_call_operand.vmem [shape: f32[2,2,16,64], index: 4, kind: output, shape index: {0}]
  %s5 = inlined_call_operand.vmem [shape: f32[2,2,16,128], index: 5, kind: output, shape index: {1}]
  %6 = xla_tuple %s4, %s5
  %s7 = sld [smem:[#allocation0]]
  $region57: #{attention_forward.2} parent=0
    _
  %s9 = ssub.s32 1, %s7
  %s10 = scalar_select 0, %s9, %s7
  loop: start=0, step=1, limit=4
  $region2: #{attention_forward.2} parent=0 // loop_pre_header
    _
  $region3: #{attention_forward.2} parent=0 // loop_header
    %s12 = sphi 0, %s16
    %p13 = scmp.ge.s32.totalorder %s12, 4
    %s19 = sphi 0, %s31
    %s20 = sphi 0, %s27
    %s21 = sphi 0, %s19
    %s22 = sphi 0, %s20
    %s23 = sphi 0, %s21
    %s24 = sphi 0, %s22
    %s36 = sphi 0, %s38
    %s39 = sphi 0, %s36
    %s40 = sphi 0, %s39
    %s56 = sphi 0, %s40
    %s60 = sphi 0, %s60
    %s62 = sphi 0, %s60
    %s63 = sphi 0, %s62
    %s77 = sphi 0, %s63
    %s81 = sphi 0, %s81
    %s83 = sphi 0, %s81
    %s84 = sphi 0, %s83
    %s98 = sphi 0, %s84
    %s102 = sphi 0, %s102
    %s104 = sphi 0, %s102
    %s105 = sphi 0, %s104
    %s119 = sphi 0, %s105
    %s127 = sphi 0, %s129
    %s130 = sphi 0, %s127
    %s131 = sphi 0, %s130
    %s147 = sphi 0, %s131
    %s155 = sphi 0, %s157
    %s158 = sphi 0, %s155
    %s159 = sphi 0, %s158
    %s175 = sphi 0, %s159
  $region4: #{attention_forward.2} parent=0 // loop_header_branch
    %15 = sbr.rel (%p13) target = $region8
  $region5: #{attention_forward.2} parent=0 // loop_body
    %s17 = ssub.s32 %s12, 1
    %s18 = ssub.s32 %s12, 2
    %s25 = sadd.s32 1, %s20
    %p26 = scmp.ge.s32.totalorder %s25, 1
    %s27 = scalar_select %p26, 0, %s25
    %s28 = sadd.s32 1, %s19
    %s29 = scalar_select %p26, %s28, %s19
    %p30 = scmp.ge.s32.totalorder %s29, 2
    %s31 = scalar_select %p30, 0, %s29
    %s32 = ssub.s32 %s19, %s31
    %s33 = ssub.s32 %s20, %s27
    %s34 = sor.u32 %s32, %s33
    %p35 = scmp.eq.s32.totalorder %s34, 0
    %s37 = sadd.s32 %s36, 1
    %s38 = scalar_select %p35, %s36, %s37
    %p41 = pneg %p35
    %p42 = scmp.eq.s32.totalorder %s12, 1
    %p43 = por %p41, %p42
    %p44 = scmp.ne.s32.totalorder %s36, %s39
    %p45 = scmp.eq.s32.totalorder %s12, 0
    %p46 = por %p44, %p45
    %p47 = scmp.ne.s32.totalorder %s36, %s39
    %p48 = scmp.eq.s32.totalorder %s17, 1
    %p49 = por %p47, %p48
    %p50 = scmp.ne.s32.totalorder %s39, %s40
    %p51 = scmp.eq.s32.totalorder %s17, 0
    %p52 = por %p50, %p51
    %p53 = scmp.ne.s32.totalorder %s39, %s40
    %p54 = scmp.eq.s32.totalorder %s18, 1
    %p55 = por %p53, %p54
    %p57 = scmp.ne.s32.totalorder %s40, %s56
    %p58 = scmp.eq.s32.totalorder %s18, 0
    %p59 = por %p57, %p58
    %s61 = sadd.s32 %s60, 1
    %p64 = scmp.eq.s32.totalorder %s12, 1
    %p65 = scmp.ne.s32.totalorder %s60, %s62
    %p66 = scmp.eq.s32.totalorder %s12, 0
    %p67 = por %p65, %p66
    %p68 = scmp.ne.s32.totalorder %s60, %s62
    %p69 = scmp.eq.s32.totalorder %s17, 1
    %p70 = por %p68, %p69
    %p71 = scmp.ne.s32.totalorder %s62, %s63
    %p72 = scmp.eq.s32.totalorder %s17, 0
    %p73 = por %p71, %p72
    %p74 = scmp.ne.s32.totalorder %s62, %s63
    %p75 = scmp.eq.s32.totalorder %s18, 1
    %p76 = por %p74, %p75
    %p78 = scmp.ne.s32.totalorder %s63, %s77
    %p79 = scmp.eq.s32.totalorder %s18, 0
    %p80 = por %p78, %p79
    %s82 = sadd.s32 %s81, 1
    %p85 = scmp.eq.s32.totalorder %s12, 1
    %p86 = scmp.ne.s32.totalorder %s81, %s83
    %p87 = scmp.eq.s32.totalorder %s12, 0
    %p88 = por %p86, %p87
    %p89 = scmp.ne.s32.totalorder %s81, %s83
    %p90 = scmp.eq.s32.totalorder %s17, 1
    %p91 = por %p89, %p90
    %p92 = scmp.ne.s32.totalorder %s83, %s84
    %p93 = scmp.eq.s32.totalorder %s17, 0
    %p94 = por %p92, %p93
    %p95 = scmp.ne.s32.totalorder %s83, %s84
    %p96 = scmp.eq.s32.totalorder %s18, 1
    %p97 = por %p95, %p96
    %p99 = scmp.ne.s32.totalorder %s84, %s98
    %p100 = scmp.eq.s32.totalorder %s18, 0
    %p101 = por %p99, %p100
    %s103 = sadd.s32 %s102, 1
    %p106 = scmp.eq.s32.totalorder %s12, 1
    %p107 = scmp.ne.s32.totalorder %s102, %s104
    %p108 = scmp.eq.s32.totalorder %s12, 0
    %p109 = por %p107, %p108
    %p110 = scmp.ne.s32.totalorder %s102, %s104
    %p111 = scmp.eq.s32.totalorder %s17, 1
    %p112 = por %p110, %p111
    %p113 = scmp.ne.s32.totalorder %s104, %s105
    %p114 = scmp.eq.s32.totalorder %s17, 0
    %p115 = por %p113, %p114
    %p116 = scmp.ne.s32.totalorder %s104, %s105
    %p117 = scmp.eq.s32.totalorder %s18, 1
    %p118 = por %p116, %p117
    %p120 = scmp.ne.s32.totalorder %s105, %s119
    %p121 = scmp.eq.s32.totalorder %s18, 0
    %p122 = por %p120, %p121
    %s123 = ssub.s32 %s19, %s31
    %s124 = ssub.s32 %s20, %s27
    %s125 = sor.u32 %s123, %s124
    %p126 = scmp.eq.s32.totalorder %s125, 0
    %s128 = sadd.s32 %s127, 1
    %s129 = scalar_select %p126, %s127, %s128
    %p132 = pneg %p126
    %p133 = scmp.eq.s32.totalorder %s12, 1
    %p134 = por %p132, %p133
    %p135 = scmp.ne.s32.totalorder %s127, %s130
    %p136 = scmp.eq.s32.totalorder %s12, 0
    %p137 = por %p135, %p136
    %p138 = scmp.ne.s32.totalorder %s127, %s130
    %p139 = scmp.eq.s32.totalorder %s17, 1
    %p140 = por %p138, %p139
    %p141 = scmp.ne.s32.totalorder %s130, %s131
    %p142 = scmp.eq.s32.totalorder %s17, 0
    %p143 = por %p141, %p142
    %p144 = scmp.ne.s32.totalorder %s130, %s131
    %p145 = scmp.eq.s32.totalorder %s18, 1
    %p146 = por %p144, %p145
    %p148 = scmp.ne.s32.totalorder %s131, %s147
    %p149 = scmp.eq.s32.totalorder %s18, 0
    %p150 = por %p148, %p149
    %s151 = ssub.s32 %s19, %s31
    %s152 = ssub.s32 %s20, %s27
    %s153 = sor.u32 %s151, %s152
    %p154 = scmp.eq.s32.totalorder %s153, 0
    %s156 = sadd.s32 %s155, 1
    %s157 = scalar_select %p154, %s155, %s156
    %p160 = pneg %p154
    %p161 = scmp.eq.s32.totalorder %s12, 1
    %p162 = por %p160, %p161
    %p163 = scmp.ne.s32.totalorder %s155, %s158
    %p164 = scmp.eq.s32.totalorder %s12, 0
    %p165 = por %p163, %p164
    %p166 = scmp.ne.s32.totalorder %s155, %s158
    %p167 = scmp.eq.s32.totalorder %s17, 1
    %p168 = por %p166, %p167
    %p169 = scmp.ne.s32.totalorder %s158, %s159
    %p170 = scmp.eq.s32.totalorder %s17, 0
    %p171 = por %p169, %p170
    %p172 = scmp.ne.s32.totalorder %s158, %s159
    %p173 = scmp.eq.s32.totalorder %s18, 1
    %p174 = por %p172, %p173
    %p176 = scmp.ne.s32.totalorder %s159, %s175
    %p177 = scmp.eq.s32.totalorder %s18, 0
    %p178 = por %p176, %p177
    %p179 = scmp.le.s32.totalorder 1, %s12
    %p180 = scmp.lt.s32.totalorder %s12, 3
    %p181 = pnand %p179, %p180
    %p182 = pneg %p181
    // Predicated region
    $region9: #{attention_forward.2} parent=5 // pred_check
      _
    $region10: #{attention_forward.2} parent=5 // pred_check_branch
      %184 = sbr.rel (%p181) target = $region12
    $region11: #{attention_forward.2} parent=5 // pred_region
      %s185 = ssub.s32 %s12, 1
      // Predicated region
      $region13: #{attention_forward.2} parent=11 // pred_check
        %p186 = pneg %p73
      $region14: #{attention_forward.2} parent=11 // pred_check_branch
        %188 = sbr.rel (%p186) target = $region16
      $region15: #{attention_forward.2} parent=11 // pred_region
        _
      $region16: #{attention_forward.2} parent=11 // pred_fallthru
        _
      // Predicated region
      $region17: #{attention_forward.2} parent=11 // pred_check
        %p189 = pneg %p94
      $region18: #{attention_forward.2} parent=11 // pred_check_branch
        %191 = sbr.rel (%p189) target = $region20
      $region19: #{attention_forward.2} parent=11 // pred_region
        _
      $region20: #{attention_forward.2} parent=11 // pred_fallthru
        _
      // Predicated region
      $region21: #{attention_forward.2} parent=11 // pred_check
        %p192 = pneg %p115
      $region22: #{attention_forward.2} parent=11 // pred_check_branch
        %194 = sbr.rel (%p192) target = $region24
      $region23: #{attention_forward.2} parent=11 // pred_region
        _
      $region24: #{attention_forward.2} parent=11 // pred_fallthru
        _
    $region12: #{attention_forward.2} parent=5 // pred_fallthru
      _
    %p195 = scmp.lt.s32.totalorder %s12, 2
    // Predicated region
    $region25: #{attention_forward.2} parent=5 // pred_check
      %p196 = pneg %p195
    $region26: #{attention_forward.2} parent=5 // pred_check_branch
      %198 = sbr.rel (%p196) target = $region28
    $region27: #{attention_forward.2} parent=5 // pred_region
      // Predicated region
      $region29: #{attention_forward.2} parent=27 // pred_check
        %p199 = pneg %p46
      $region30: #{attention_forward.2} parent=27 // pred_check_branch
        %201 = sbr.rel (%p199) target = $region32
      $region31: #{attention_forward.2} parent=27 // pred_region
        %s202 = smul.u32 2, %s20
        %p203 = scmp.lt.s32.totalorder %s19, 1
        %s204 = scalar_select %p203, %s19, 1
        %p205 = scmp.lt.s32.totalorder %s202, 1
        %s206 = scalar_select %p205, %s202, 1
        %s207 = smul.addr %s204, 2
        %s208 = sadd.s32 %s206, %s207
        %s209 = smul.addr %s208, 8
        %s210 = scalar_lea.vmem %s0, %s209
        %s211 = smul.u32 2, %s20
      $region32: #{attention_forward.2} parent=27 // pred_fallthru
        _
    $region28: #{attention_forward.2} parent=5 // pred_fallthru
      _
    %p212 = scmp.le.s32.totalorder 1, %s12
    %p213 = scmp.lt.s32.totalorder %s12, 3
    %p214 = pnand %p212, %p213
    %p215 = pneg %p214
    // Predicated region
    $region33: #{attention_forward.2} parent=5 // pred_check
      _
    $region34: #{attention_forward.2} parent=5 // pred_check_branch
      %217 = sbr.rel (%p214) target = $region36
    $region35: #{attention_forward.2} parent=5 // pred_region
      %s218 = ssub.s32 %s12, 1
      %s219 = smul.u32 2, %s22
      %p220 = scmp.lt.s32.totalorder %s21, 1
      %s221 = scalar_select %p220, %s21, 1
      %p222 = scmp.lt.s32.totalorder %s219, 1
      %s223 = scalar_select %p222, %s219, 1
      %s224 = smul.addr %s221, 2
      %s225 = sadd.s32 %s223, %s224
      %s226 = smul.addr %s225, 8
      %s227 = scalar_lea.vmem %s0, %s226
      %p228 = pneg %p52
      %p229 = pneg %p49
      %p230 = pneg %p73
      %p231 = pneg %p70
      %p232 = pneg %p94
      %p233 = pneg %p91
      %p234 = pneg %p115
      %p235 = pneg %p112
      %p236 = pneg %p143
      %p237 = pneg %p140
      %s238 = smul.u32 2, %s22
      %p239 = scmp.lt.s32.totalorder %s21, 1
      %s240 = scalar_select %p239, %s21, 1
      %p241 = scmp.lt.s32.totalorder %s238, 1
      %s242 = scalar_select %p241, %s238, 1
      %s243 = smul.addr %s240, 4
      %s244 = sadd.s32 %s242, %s243
      %s245 = smul.addr %s244, 8
      %s246 = scalar_lea.vmem %s4, %s245
      %p247 = pneg %p171
      %p248 = pneg %p168
      %s249 = smul.u32 2, %s22
      %p250 = scmp.lt.s32.totalorder %s21, 1
      %s251 = scalar_select %p250, %s21, 1
      %p252 = scmp.lt.s32.totalorder %s249, 1
      %s253 = scalar_select %p252, %s249, 1
      %s254 = smul.addr %s251, 4
      %s255 = sadd.s32 %s253, %s254
      %s256 = smul.addr %s255, 8
      %s257 = scalar_lea.vmem %s5, %s256
      %s258 = smul.u32 2, %s22
      %p259 = scmp.lt.s32.totalorder %s21, 1
      %s260 = scalar_select %p259, %s21, 1
      %p261 = scmp.lt.s32.totalorder %s258, 1
      %s262 = scalar_select %p261, %s258, 1
      %s263 = smul.addr %s260, 2
      %s264 = sadd.s32 %s262, %s263
      %s265 = smul.addr %s264, 8
      %s266 = scalar_lea.vmem %s0, %s265
      %s267 = smul.u32 2, %s22
      %s268 = smul.u32 2, %s22
      %p269 = scmp.lt.s32.totalorder %s21, 1
      %s270 = scalar_select %p269, %s21, 1
      %p271 = scmp.lt.s32.totalorder %s268, 1
      %s272 = scalar_select %p271, %s268, 1
      %s273 = smul.addr %s270, 4
      %s274 = sadd.s32 %s272, %s273
      %s275 = smul.addr %s274, 8
      %s276 = scalar_lea.vmem %s4, %s275
      %s277 = smul.u32 2, %s22
      %s278 = smul.u32 2, %s22
      %p279 = scmp.lt.s32.totalorder %s21, 1
      %s280 = scalar_select %p279, %s21, 1
      %p281 = scmp.lt.s32.totalorder %s278, 1
      %s282 = scalar_select %p281, %s278, 1
      %s283 = smul.addr %s280, 4
      %s284 = sadd.s32 %s282, %s283
      %s285 = smul.addr %s284, 8
      %s286 = scalar_lea.vmem %s5, %s285
      %s287 = smul.u32 2, %s22
      %v288 = vld [vmem:[%s266] sm:$0xff]
      %v289 = vld [vmem:[%s266 + $0x8] sm:$0xff]
      %v290 = vld [vmem:[%s1] sm:$0x1]
      %vm291 = vcmask 261120
      %v292 = vsel %vm291, %v288, 0.0
      %293 = vadd.xlane.f32.xlu0 %v292
      %v294 = vpop.xlane.xlu0 %293
      %v295 = vsel %vm291, %v289, 0.0
      %296 = vadd.xlane.f32.xlu0 %v295
      %v297 = vpop.xlane.xlu0 %296
      %v298 = vrcp.pop 32.0
      %v299 = vmul.f32 %v294, %v298
      %v300 = vmul.f32 %v297, %v298
      %v301 = vsub.f32 %v288, %v299
      %v302 = vsub.f32 %v289, %v300
      %v303 = vmul.f32 %v301, %v301
      %v304 = vmul.f32 %v302, %v302
      %v305 = vsel %vm291, %v303, 0.0
      %306 = vadd.xlane.f32.xlu0 %v305
      %v307 = vpop.xlane.xlu0 %306
      %v308 = vsel %vm291, %v304, 0.0
      %309 = vadd.xlane.f32.xlu0 %v308
      %v310 = vpop.xlane.xlu0 %309
      %v311 = vmul.f32 %v307, %v298
      %v312 = vmul.f32 %v310, %v298
      %v313 = vadd.f32 %v311, 1e-05
      %v314 = vadd.f32 %v312, 1e-05
      %v315 = vrsqrt.pop %v313
      %v316 = vrsqrt.pop %v314
      %v317 = vmul.f32 %v301, %v315
      %v318 = vmul.f32 %v302, %v316
      %v320 = vlaneseq
      %v321 = vshrl.u32 %v320, 7
      %v322 = vsub.s32 0, %v321
      %v323 = vrot.slane %v290, %v322
      %v325 = vmul.f32 %v317, %v323
      %v326 = vmul.f32 %v318, %v323
      %v327 = vld [vmem:[%s2] sm:$0xff]
      %v328 = vld [vmem:[%s2 + $0x8] sm:$0xff]
      %v329 = vld [vmem:[%s2 + $0x10] sm:$0xff]
      %v330 = vld [vmem:[%s2 + $0x18] sm:$0xff]
      %v332 = vsel %vm291, %v325, 0
      %v335 = vsel %vm291, %v326, 0
      %337 = vmatprep.subr.mxu0 0.0
      %338 = vmatpush1.msra.mxu0 %v327
      %339 = vmatprep.subr.mxu0 0.0
      %340 = vmatpush1.msra.mxu0 %v328
      %341 = vmatprep.subr.mxu0 0.0
      %342 = vmatpush1.msra.mxu0 %v329
      %343 = vmatprep.subr.mxu0 0.0
      %344 = vmatpush1.msra.mxu0 %v330
      %345 = vmatprep.subr.mxu0 0.0
      %346 = vmatpush1.msra.mxu0 0.0
      %347 = vmatprep.subr.mxu0 0.0
      %348 = vmatpush1.msra.mxu0 0.0
      %349 = vmatprep.subr.mxu0 0.0
      %350 = vmatpush1.msra.mxu0 0.0
      %351 = vmatprep.subr.mxu0 0.0
      %352 = vmatpush1.msra.mxu0 0.0
      %353 = vmatprep.subr.mxu0 0.0
      %354 = vmatpush1.msra.mxu0 0.0
      %355 = vmatprep.subr.mxu0 0.0
      %356 = vmatpush1.msra.mxu0 0.0
      %357 = vmatprep.subr.mxu0 0.0
      %358 = vmatpush1.msra.mxu0 0.0
      %359 = vmatprep.subr.mxu0 0.0
      %360 = vmatpush1.msra.mxu0 0.0
      %361 = vmatprep.subr.mxu0 0.0
      %362 = vmatpush1.msra.mxu0 0.0
      %363 = vmatprep.subr.mxu0 0.0
      %364 = vmatpush1.msra.mxu0 0.0
      %365 = vmatprep.subr.mxu0 0.0
      %366 = vmatpush1.msra.mxu0 0.0
      %367 = vmatprep.subr.mxu0 0.0
      %368 = vmatpush1.msra.mxu0 0.0
      %369 = vmatprep.subr.mxu0 0.0
      %370 = vmatpush1.msra.mxu0 0.0
      %371 = vmatprep.subr.mxu0 0.0
      %372 = vmatpush1.msra.mxu0 0.0
      %373 = vmatprep.subr.mxu0 0.0
      %374 = vmatpush1.msra.mxu0 0.0
      %375 = vmatprep.subr.mxu0 0.0
      %376 = vmatpush1.msra.mxu0 0.0
      %377 = vmatprep.subr.mxu0 0.0
      %378 = vmatpush1.msra.mxu0 0.0
      %379 = vmatprep.subr.mxu0 0.0
      %380 = vmatpush1.msra.mxu0 0.0
      %381 = vmatprep.subr.mxu0 0.0
      %382 = vmatpush1.msra.mxu0 0.0
      %383 = vmatprep.subr.mxu0 0.0
      %384 = vmatpush1.msra.mxu0 0.0
      %385 = vmatprep.subr.mxu0 0.0
      %386 = vmatpush1.msra.mxu0 0.0
      %387 = vmatprep.subr.mxu0 0.0
      %388 = vmatpush1.msra.mxu0 0.0
      %389 = vmatprep.subr.mxu0 0.0
      %390 = vmatpush1.msra.mxu0 0.0
      %391 = vmatprep.subr.mxu0 0.0
      %392 = vmatpush1.msra.mxu0 0.0
      %393 = vmatprep.subr.mxu0 0.0
      %394 = vmatpush1.msra.mxu0 0.0
      %395 = vmatprep.subr.mxu0 0.0
      %396 = vmatpush1.msra.mxu0 0.0
      %397 = vmatprep.subr.mxu0 0.0
      %398 = vmatpush1.msra.mxu0 0.0
      %399 = vmatprep.subr.mxu0 0.0
      %400 = vmatpush1.msra.mxu0 0.0
      %401 = vmatprep.mubr.f32.mxu0 0.0
      %402 = vmatmul.mubr.f32.gmra.mrb[0].mxu0 %v332
      %v403 = vpop.f32.mrb[0].mxu0
      %v404 = vadd.f32 0.0, %v403
      %v405 = vpop.f32.mrb[0].mxu0
      %406 = vmatprep.mubr.f32.mxu0 0.0
      %407 = vmatmul.mubr.f32.gmra.mrb[0].mxu0 %v335
      %v408 = vpop.f32.mrb[0].mxu0
      %v409 = vadd.f32 0.0, %v408
      %v410 = vpop.f32.mrb[0].mxu0
      %411 = vdwg.mxu0
      %vm412 = vcmask 523264
      %413 = vst.msk [vmem:[%s276] sm:$0xff] %vm412, %v404
      %414 = vst.msk [vmem:[%s276 + $0x8] sm:$0xff] %vm412, %v409
      %v415 = vld [vmem:[%s3] sm:$0xff]
      %v416 = vld [vmem:[%s3 + $0x8] sm:$0xff]
      %v417 = vld [vmem:[%s3 + $0x10] sm:$0xff]
      %v418 = vld [vmem:[%s3 + $0x18] sm:$0xff]
      %419 = vmatprep.subr.mxu0 0.0
      %420 = vmatpush1.msra.mxu0 %v415
      %421 = vmatprep.subr.mxu0 0.0
      %422 = vmatpush1.msra.mxu0 %v416
      %423 = vmatprep.subr.mxu0 0.0
      %424 = vmatpush1.msra.mxu0 %v417
      %425 = vmatprep.subr.mxu0 0.0
      %426 = vmatpush1.msra.mxu0 %v418
      %427 = vmatprep.subr.mxu0 0.0
      %428 = vmatpush1.msra.mxu0 0.0
      %429 = vmatprep.subr.mxu0 0.0
      %430 = vmatpush1.msra.mxu0 0.0
      %431 = vmatprep.subr.mxu0 0.0
      %432 = vmatpush1.msra.mxu0 0.0
      %433 = vmatprep.subr.mxu0 0.0
      %434 = vmatpush1.msra.mxu0 0.0
      %435 = vmatprep.subr.mxu0 0.0
      %436 = vmatpush1.msra.mxu0 0.0
      %437 = vmatprep.subr.mxu0 0.0
      %438 = vmatpush1.msra.mxu0 0.0
      %439 = vmatprep.subr.mxu0 0.0
      %440 = vmatpush1.msra.mxu0 0.0
      %441 = vmatprep.subr.mxu0 0.0
      %442 = vmatpush1.msra.mxu0 0.0
      %443 = vmatprep.subr.mxu0 0.0
      %444 = vmatpush1.msra.mxu0 0.0
      %445 = vmatprep.subr.mxu0 0.0
      %446 = vmatpush1.msra.mxu0 0.0
      %447 = vmatprep.subr.mxu0 0.0
      %448 = vmatpush1.msra.mxu0 0.0
      %449 = vmatprep.subr.mxu0 0.0
      %450 = vmatpush1.msra.mxu0 0.0
      %451 = vmatprep.subr.mxu0 0.0
      %452 = vmatpush1.msra.mxu0 0.0
      %453 = vmatprep.subr.mxu0 0.0
      %454 = vmatpush1.msra.mxu0 0.0
      %455 = vmatprep.subr.mxu0 0.0
      %456 = vmatpush1.msra.mxu0 0.0
      %457 = vmatprep.subr.mxu0 0.0
      %458 = vmatpush1.msra.mxu0 0.0
      %459 = vmatprep.subr.mxu0 0.0
      %460 = vmatpush1.msra.mxu0 0.0
      %461 = vmatprep.subr.mxu0 0.0
      %462 = vmatpush1.msra.mxu0 0.0
      %463 = vmatprep.subr.mxu0 0.0
      %464 = vmatpush1.msra.mxu0 0.0
      %465 = vmatprep.subr.mxu0 0.0
      %466 = vmatpush1.msra.mxu0 0.0
      %467 = vmatprep.subr.mxu0 0.0
      %468 = vmatpush1.msra.mxu0 0.0
      %469 = vmatprep.subr.mxu0 0.0
      %470 = vmatpush1.msra.mxu0 0.0
      %471 = vmatprep.subr.mxu0 0.0
      %472 = vmatpush1.msra.mxu0 0.0
      %473 = vmatprep.subr.mxu0 0.0
      %474 = vmatpush1.msra.mxu0 0.0
      %475 = vmatprep.subr.mxu0 0.0
      %476 = vmatpush1.msra.mxu0 0.0
      %477 = vmatprep.subr.mxu0 0.0
      %478 = vmatpush1.msra.mxu0 0.0
      %479 = vmatprep.subr.mxu0 0.0
      %480 = vmatpush1.msra.mxu0 0.0
      %481 = vmatprep.subr.mxu0 0.0
      %482 = vmatpush1.msra.mxu0 0.0
      %483 = vmatprep.mubr.f32.mxu0 0.0
      %484 = vmatmul.mubr.f32.gmra.mrb[0].mxu0 %v332
      %v485 = vpop.f32.mrb[0].mxu0
      %v486 = vadd.f32 0.0, %v485
      %v487 = vpop.f32.mrb[0].mxu0
      %488 = vmatprep.mubr.f32.mxu0 0.0
      %489 = vmatmul.mubr.f32.gmra.mrb[0].mxu0 %v335
      %v490 = vpop.f32.mrb[0].mxu0
      %v491 = vadd.f32 0.0, %v490
      %v492 = vpop.f32.mrb[0].mxu0
      %493 = vdwg.mxu0
      %494 = vst [vmem:[%s286] sm:$0xff] %v486
      %495 = vst [vmem:[%s286 + $0x8] sm:$0xff] %v491
      %s496 = scalar_lea.vmem %s2, 32
      %v497 = vld [vmem:[%s496] sm:$0xff]
      %v498 = vld [vmem:[%s496 + $0x8] sm:$0xff]
      %v499 = vld [vmem:[%s496 + $0x10] sm:$0xff]
      %v500 = vld [vmem:[%s496 + $0x18] sm:$0xff]
      %501 = vmatprep.subr.mxu0 0.0
      %502 = vmatpush1.msra.mxu0 %v497
      %503 = vmatprep.subr.mxu0 0.0
      %504 = vmatpush1.msra.mxu0 %v498
      %505 = vmatprep.subr.mxu0 0.0
      %506 = vmatpush1.msra.mxu0 %v499
      %507 = vmatprep.subr.mxu0 0.0
      %508 = vmatpush1.msra.mxu0 %v500
      %509 = vmatprep.subr.mxu0 0.0
      %510 = vmatpush1.msra.mxu0 0.0
      %511 = vmatprep.subr.mxu0 0.0
      %512 = vmatpush1.msra.mxu0 0.0
      %513 = vmatprep.subr.mxu0 0.0
      %514 = vmatpush1.msra.mxu0 0.0
      %515 = vmatprep.subr.mxu0 0.0
      %516 = vmatpush1.msra.mxu0 0.0
      %517 = vmatprep.subr.mxu0 0.0
      %518 = vmatpush1.msra.mxu0 0.0
      %519 = vmatprep.subr.mxu0 0.0
      %520 = vmatpush1.msra.mxu0 0.0
      %521 = vmatprep.subr.mxu0 0.0
      %522 = vmatpush1.msra.mxu0 0.0
      %523 = vmatprep.subr.mxu0 0.0
      %524 = vmatpush1.msra.mxu0 0.0
      %525 = vmatprep.subr.mxu0 0.0
      %526 = vmatpush1.msra.mxu0 0.0
      %527 = vmatprep.subr.mxu0 0.0
      %528 = vmatpush1.msra.mxu0 0.0
      %529 = vmatprep.subr.mxu0 0.0
      %530 = vmatpush1.msra.mxu0 0.0
      %531 = vmatprep.subr.mxu0 0.0
      %532 = vmatpush1.msra.mxu0 0.0
      %533 = vmatprep.subr.mxu0 0.0
      %534 = vmatpush1.msra.mxu0 0.0
      %535 = vmatprep.subr.mxu0 0.0
      %536 = vmatpush1.msra.mxu0 0.0
      %537 = vmatprep.subr.mxu0 0.0
      %538 = vmatpush1.msra.mxu0 0.0
      %539 = vmatprep.subr.mxu0 0.0
      %540 = vmatpush1.msra.mxu0 0.0
      %541 = vmatprep.subr.mxu0 0.0
      %542 = vmatpush1.msra.mxu0 0.0
      %543 = vmatprep.subr.mxu0 0.0
      %544 = vmatpush1.msra.mxu0 0.0
      %545 = vmatprep.subr.mxu0 0.0
      %546 = vmatpush1.msra.mxu0 0.0
      %547 = vmatprep.subr.mxu0 0.0
      %548 = vmatpush1.msra.mxu0 0.0
      %549 = vmatprep.subr.mxu0 0.0
      %550 = vmatpush1.msra.mxu0 0.0
      %551 = vmatprep.subr.mxu0 0.0
      %552 = vmatpush1.msra.mxu0 0.0
      %553 = vmatprep.subr.mxu0 0.0
      %554 = vmatpush1.msra.mxu0 0.0
      %555 = vmatprep.subr.mxu0 0.0
      %556 = vmatpush1.msra.mxu0 0.0
      %557 = vmatprep.subr.mxu0 0.0
      %558 = vmatpush1.msra.mxu0 0.0
      %559 = vmatprep.subr.mxu0 0.0
      %560 = vmatpush1.msra.mxu0 0.0
      %561 = vmatprep.subr.mxu0 0.0
      %562 = vmatpush1.msra.mxu0 0.0
      %563 = vmatprep.subr.mxu0 0.0
      %564 = vmatpush1.msra.mxu0 0.0
      %565 = vmatprep.mubr.f32.mxu0 0.0
      %566 = vmatmul.mubr.f32.gmra.mrb[0].mxu0 %v332
      %v567 = vpop.f32.mrb[0].mxu0
      %v568 = vadd.f32 0.0, %v567
      %v569 = vpop.f32.mrb[0].mxu0
      %570 = vmatprep.mubr.f32.mxu0 0.0
      %571 = vmatmul.mubr.f32.gmra.mrb[0].mxu0 %v335
      %v572 = vpop.f32.mrb[0].mxu0
      %v573 = vadd.f32 0.0, %v572
      %v574 = vpop.f32.mrb[0].mxu0
      %575 = vdwg.mxu0
      %s576 = scalar_lea.vmem %s276, 16
      %577 = vst.msk [vmem:[%s576] sm:$0xff] %vm412, %v568
      %578 = vst.msk [vmem:[%s576 + $0x8] sm:$0xff] %vm412, %v573
      %s579 = scalar_lea.vmem %s3, 32
      %v580 = vld [vmem:[%s579] sm:$0xff]
      %v581 = vld [vmem:[%s579 + $0x8] sm:$0xff]
      %v582 = vld [vmem:[%s579 + $0x10] sm:$0xff]
      %v583 = vld [vmem:[%s579 + $0x18] sm:$0xff]
      %584 = vmatprep.subr.mxu0 0.0
      %585 = vmatpush1.msra.mxu0 %v580
      %586 = vmatprep.subr.mxu0 0.0
      %587 = vmatpush1.msra.mxu0 %v581
      %588 = vmatprep.subr.mxu0 0.0
      %589 = vmatpush1.msra.mxu0 %v582
      %590 = vmatprep.subr.mxu0 0.0
      %591 = vmatpush1.msra.mxu0 %v583
      %592 = vmatprep.subr.mxu0 0.0
      %593 = vmatpush1.msra.mxu0 0.0
      %594 = vmatprep.subr.mxu0 0.0
      %595 = vmatpush1.msra.mxu0 0.0
      %596 = vmatprep.subr.mxu0 0.0
      %597 = vmatpush1.msra.mxu0 0.0
      %598 = vmatprep.subr.mxu0 0.0
      %599 = vmatpush1.msra.mxu0 0.0
      %600 = vmatprep.subr.mxu0 0.0
      %601 = vmatpush1.msra.mxu0 0.0
      %602 = vmatprep.subr.mxu0 0.0
      %603 = vmatpush1.msra.mxu0 0.0
      %604 = vmatprep.subr.mxu0 0.0
      %605 = vmatpush1.msra.mxu0 0.0
      %606 = vmatprep.subr.mxu0 0.0
      %607 = vmatpush1.msra.mxu0 0.0
      %608 = vmatprep.subr.mxu0 0.0
      %609 = vmatpush1.msra.mxu0 0.0
      %610 = vmatprep.subr.mxu0 0.0
      %611 = vmatpush1.msra.mxu0 0.0
      %612 = vmatprep.subr.mxu0 0.0
      %613 = vmatpush1.msra.mxu0 0.0
      %614 = vmatprep.subr.mxu0 0.0
      %615 = vmatpush1.msra.mxu0 0.0
      %616 = vmatprep.subr.mxu0 0.0
      %617 = vmatpush1.msra.mxu0 0.0
      %618 = vmatprep.subr.mxu0 0.0
      %619 = vmatpush1.msra.mxu0 0.0
      %620 = vmatprep.subr.mxu0 0.0
      %621 = vmatpush1.msra.mxu0 0.0
      %622 = vmatprep.subr.mxu0 0.0
      %623 = vmatpush1.msra.mxu0 0.0
      %624 = vmatprep.subr.mxu0 0.0
      %625 = vmatpush1.msra.mxu0 0.0
      %626 = vmatprep.subr.mxu0 0.0
      %627 = vmatpush1.msra.mxu0 0.0
      %628 = vmatprep.subr.mxu0 0.0
      %629 = vmatpush1.msra.mxu0 0.0
      %630 = vmatprep.subr.mxu0 0.0
      %631 = vmatpush1.msra.mxu0 0.0
      %632 = vmatprep.subr.mxu0 0.0
      %633 = vmatpush1.msra.mxu0 0.0
      %634 = vmatprep.subr.mxu0 0.0
      %635 = vmatpush1.msra.mxu0 0.0
      %636 = vmatprep.subr.mxu0 0.0
      %637 = vmatpush1.msra.mxu0 0.0
      %638 = vmatprep.subr.mxu0 0.0
      %639 = vmatpush1.msra.mxu0 0.0
      %640 = vmatprep.subr.mxu0 0.0
      %641 = vmatpush1.msra.mxu0 0.0
      %642 = vmatprep.subr.mxu0 0.0
      %643 = vmatpush1.msra.mxu0 0.0
      %644 = vmatprep.subr.mxu0 0.0
      %645 = vmatpush1.msra.mxu0 0.0
      %646 = vmatprep.subr.mxu0 0.0
      %647 = vmatpush1.msra.mxu0 0.0
      %648 = vmatprep.mubr.f32.mxu0 0.0
      %649 = vmatmul.mubr.f32.gmra.mrb[0].mxu0 %v332
      %v650 = vpop.f32.mrb[0].mxu0
      %v651 = vadd.f32 0.0, %v650
      %v652 = vpop.f32.mrb[0].mxu0
      %653 = vmatprep.mubr.f32.mxu0 0.0
      %654 = vmatmul.mubr.f32.gmra.mrb[0].mxu0 %v335
      %v655 = vpop.f32.mrb[0].mxu0
      %v656 = vadd.f32 0.0, %v655
      %v657 = vpop.f32.mrb[0].mxu0
      %658 = vdwg.mxu0
      %s659 = scalar_lea.vmem %s286, 16
      %660 = vst [vmem:[%s659] sm:$0xff] %v651
      %661 = vst [vmem:[%s659 + $0x8] sm:$0xff] %v656
      %s662 = smul.u32 2, %s22
      %p663 = scmp.lt.s32.totalorder %s21, 1
      %s664 = scalar_select %p663, %s21, 1
      %p665 = scmp.lt.s32.totalorder %s662, 1
      %s666 = scalar_select %p665, %s662, 1
      %s667 = smul.addr %s664, 4
      %s668 = sadd.s32 %s666, %s667
      %s669 = smul.addr %s668, 8
      %s670 = scalar_lea.vmem %s4, %s669
      %s671 = smul.u32 2, %s22
      %p672 = scmp.lt.s32.totalorder %s21, 1
      %s673 = scalar_select %p672, %s21, 1
      %p674 = scmp.lt.s32.totalorder %s671, 1
      %s675 = scalar_select %p674, %s671, 1
      %s676 = smul.addr %s673, 4
      %s677 = sadd.s32 %s675, %s676
      %s678 = smul.addr %s677, 8
      %s679 = scalar_lea.vmem %s5, %s678
      // Predicated region
      $region37: #{attention_forward.2} parent=35 // pred_check
        %p680 = pneg %p140
      $region38: #{attention_forward.2} parent=35 // pred_check_branch
        %682 = sbr.rel (%p680) target = $region40
      $region39: #{attention_forward.2} parent=35 // pred_region
        %s683 = smul.u32 2, %s22
      $region40: #{attention_forward.2} parent=35 // pred_fallthru
        _
      // Predicated region
      $region41: #{attention_forward.2} parent=35 // pred_check
        %p684 = pneg %p168
      $region42: #{attention_forward.2} parent=35 // pred_check_branch
        %686 = sbr.rel (%p684) target = $region44
      $region43: #{attention_forward.2} parent=35 // pred_region
        %s687 = smul.u32 2, %s22
      $region44: #{attention_forward.2} parent=35 // pred_fallthru
        _
    $region36: #{attention_forward.2} parent=5 // pred_fallthru
      _
    %p688 = scmp.le.s32.totalorder 2, %s12
    // Predicated region
    $region45: #{attention_forward.2} parent=5 // pred_check
      %p689 = pneg %p688
    $region46: #{attention_forward.2} parent=5 // pred_check_branch
      %691 = sbr.rel (%p689) target = $region48
    $region47: #{attention_forward.2} parent=5 // pred_region
      %s692 = ssub.s32 %s12, 2
      // Predicated region
      $region49: #{attention_forward.2} parent=47 // pred_check
        %p693 = pneg %p146
      $region50: #{attention_forward.2} parent=47 // pred_check_branch
        %695 = sbr.rel (%p693) target = $region52
      $region51: #{attention_forward.2} parent=47 // pred_region
        %s696 = smul.u32 2, %s24
        %p697 = scmp.lt.s32.totalorder %s23, 1
        %s698 = scalar_select %p697, %s23, 1
        %p699 = scmp.lt.s32.totalorder %s696, 1
        %s700 = scalar_select %p699, %s696, 1
        %s701 = smul.addr %s698, 4
        %s702 = sadd.s32 %s700, %s701
        %s703 = smul.addr %s702, 8
        %s704 = scalar_lea.vmem %s4, %s703
      $region52: #{attention_forward.2} parent=47 // pred_fallthru
        _
      // Predicated region
      $region53: #{attention_forward.2} parent=47 // pred_check
        %p705 = pneg %p174
      $region54: #{attention_forward.2} parent=47 // pred_check_branch
        %707 = sbr.rel (%p705) target = $region56
      $region55: #{attention_forward.2} parent=47 // pred_region
        %s708 = smul.u32 2, %s24
        %p709 = scmp.lt.s32.totalorder %s23, 1
        %s710 = scalar_select %p709, %s23, 1
        %p711 = scmp.lt.s32.totalorder %s708, 1
        %s712 = scalar_select %p711, %s708, 1
        %s713 = smul.addr %s710, 4
        %s714 = sadd.s32 %s712, %s713
        %s715 = smul.addr %s714, 8
        %s716 = scalar_lea.vmem %s5, %s715
      $region56: #{attention_forward.2} parent=47 // pred_fallthru
        _
    $region48: #{attention_forward.2} parent=5 // pred_fallthru
      _
  $region6: #{attention_forward.2} parent=0 // loop_footer
    %s16 = sadd.s32 1, %s12
  $region7: #{attention_forward.2} parent=0 // loop_footer_branch
    %11 = sbr.rel target = $region3
  $region8: #{attention_forward.2} parent=0 // loop_exit
    _

// kernel: attention_forward.3
$region0: #{attention_forward.3}
  #allocation0 [shape = 'u32[]', space=smem, size = 0x4, offset = 0x4, fixed_abs, tag = 'smem constant byte address 0x4 - core index']
  #allocation1 [shape = 'u32[144,128]{1,0:T(1,128)}', space=vmem, size = 0x12000, scoped, tag = 'internal scratch']
  #allocation2 [shape = 'f32[2,16,1]{2,1,0:T(8,128)}', space=vmem, size = 0x4000, scoped, tag = 'scratch operand']
  #allocation3 [shape = 'f32[2,16,1]{2,1,0:T(8,128)}', space=vmem, size = 0x4000, scoped, tag = 'scratch operand']
  #allocation4 [shape = 'f32[2,16,64]{2,1,0:T(8,128)}', space=vmem, size = 0x4000, scoped, tag = 'scratch operand']
  #allocation5 [shape = 'f32[16,128]{1,0:T(8,128)}', space=vmem, size = 0x2000, scoped, tag = 'scratch operand']
  %s0 = inlined_call_operand.vmem [shape: f32[2,2,16,64], index: 0, kind: input, shape index: {}]
  %s1 = inlined_call_operand.vmem [shape: f32[2,2,16,128], index: 1, kind: input, shape index: {}]
  %s2 = inlined_call_operand.vmem [shape: f32[128,32], index: 2, kind: input, shape index: {}]
  %s3 = inlined_call_operand.hbm [shape: f32[2,16,32], index: 3, kind: output, shape index: {}]
  %s4 = sld [smem:[#allocation0]]
  $region53: #{attention_forward.3} parent=0
    _
  %s6 = ssub.s32 1, %s4
  %s7 = scalar_select 0, %s6, %s4
  $region1: #{attention_forward.3} parent=0
    #allocation6 [shape = 'u8[16384]{0}', space=vmem, size = 0x4000, scoped, tag = 'output window, operand 0']
    #allocation7 [shape = 's32[2]{0}', space=sflag, size = 0x8, scoped, tag = 'scoped memory for attention_forward.3']
    %8 = vsyncpa [#allocation7], 0
    %s9 = scalar_lea.sflag [#allocation7], 1
    %10 = vsyncpa %s9, 0
    loop: start=0, step=1, limit=4
    $region2: #{attention_forward.3} parent=1 // loop_pre_header
      _
    $region3: #{attention_forward.3} parent=1 // loop_header
      %s12 = sphi 0, %s16
      %p13 = scmp.ge.s32.totalorder %s12, 4
      %s19 = sphi 0, %s38
      %s20 = sphi 0, %s34
      %s21 = sphi 0, %s30
      %s22 = sphi 0, %s19
      %s23 = sphi 0, %s20
      %s24 = sphi 0, %s21
      %s25 = sphi 0, %s22
      %s26 = sphi 0, %s23
      %s27 = sphi 0, %s24
      %s43 = sphi 0, %s45
      %s46 = sphi 0, %s43
      %s47 = sphi 0, %s46
      %s63 = sphi 0, %s47
      %s71 = sphi 0, %s73
      %s74 = sphi 0, %s71
      %s75 = sphi 0, %s74
      %s91 = sphi 0, %s75
      %s95 = sphi 0, %s95
      %s97 = sphi 0, %s95
      %s98 = sphi 0, %s97
      %s112 = sphi 0, %s98
      %s120 = sphi 0, %s122
      %s123 = sphi 0, %s120
      %s124 = sphi 0, %s123
      %s140 = sphi 0, %s124
    $region4: #{attention_forward.3} parent=1 // loop_header_branch
      %15 = sbr.rel (%p13) target = $region8
    $region5: #{attention_forward.3} parent=1 // loop_body
      %s17 = ssub.s32 %s12, 1
      %s18 = ssub.s32 %s12, 2
      %s28 = sadd.s32 1, %s21
      %p29 = scmp.ge.s32.totalorder %s28, 1
      %s30 = scalar_select %p29, 0, %s28
      %s31 = sadd.s32 1, %s20
      %s32 = scalar_select %p29, %s31, %s20
      %p33 = scmp.ge.s32.totalorder %s32, 1
      %s34 = scalar_select %p33, 0, %s32
      %s35 = sadd.s32 1, %s19
      %s36 = scalar_select %p33, %s35, %s19
      %p37 = scmp.ge.s32.totalorder %s36, 2
      %s38 = scalar_select %p37, 0, %s36
      %s39 = ssub.s32 %s19, %s38
      %s40 = ssub.s32 %s20, %s34
      %s41 = sor.u32 %s39, %s40
      %p42 = scmp.eq.s32.totalorder %s41, 0
      %s44 = sadd.s32 %s43, 1
      %s45 = scalar_select %p42, %s43, %s44
      %p48 = pneg %p42
      %p49 = scmp.eq.s32.totalorder %s12, 1
      %p50 = por %p48, %p49
      %p51 = scmp.ne.s32.totalorder %s43, %s46
      %p52 = scmp.eq.s32.totalorder %s12, 0
      %p53 = por %p51, %p52
      %p54 = scmp.ne.s32.totalorder %s43, %s46
      %p55 = scmp.eq.s32.totalorder %s17, 1
      %p56 = por %p54, %p55
      %p57 = scmp.ne.s32.totalorder %s46, %s47
      %p58 = scmp.eq.s32.totalorder %s17, 0
      %p59 = por %p57, %p58
      %p60 = scmp.ne.s32.totalorder %s46, %s47
      %p61 = scmp.eq.s32.totalorder %s18, 1
      %p62 = por %p60, %p61
      %p64 = scmp.ne.s32.totalorder %s47, %s63
      %p65 = scmp.eq.s32.totalorder %s18, 0
      %p66 = por %p64, %p65
      %s67 = ssub.s32 %s19, %s38
      %s68 = ssub.s32 %s21, %s30
      %s69 = sor.u32 %s67, %s68
      %p70 = scmp.eq.s32.totalorder %s69, 0
      %s72 = sadd.s32 %s71, 1
      %s73 = scalar_select %p70, %s71, %s72
      %p76 = pneg %p70
      %p77 = scmp.eq.s32.totalorder %s12, 1
      %p78 = por %p76, %p77
      %p79 = scmp.ne.s32.totalorder %s71, %s74
      %p80 = scmp.eq.s32.totalorder %s12, 0
      %p81 = por %p79, %p80
      %p82 = scmp.ne.s32.totalorder %s71, %s74
      %p83 = scmp.eq.s32.totalorder %s17, 1
      %p84 = por %p82, %p83
      %p85 = scmp.ne.s32.totalorder %s74, %s75
      %p86 = scmp.eq.s32.totalorder %s17, 0
      %p87 = por %p85, %p86
      %p88 = scmp.ne.s32.totalorder %s74, %s75
      %p89 = scmp.eq.s32.totalorder %s18, 1
      %p90 = por %p88, %p89
      %p92 = scmp.ne.s32.totalorder %s75, %s91
      %p93 = scmp.eq.s32.totalorder %s18, 0
      %p94 = por %p92, %p93
      %s96 = sadd.s32 %s95, 1
      %p99 = scmp.eq.s32.totalorder %s12, 1
      %p100 = scmp.ne.s32.totalorder %s95, %s97
      %p101 = scmp.eq.s32.totalorder %s12, 0
      %p102 = por %p100, %p101
      %p103 = scmp.ne.s32.totalorder %s95, %s97
      %p104 = scmp.eq.s32.totalorder %s17, 1
      %p105 = por %p103, %p104
      %p106 = scmp.ne.s32.totalorder %s97, %s98
      %p107 = scmp.eq.s32.totalorder %s17, 0
      %p108 = por %p106, %p107
      %p109 = scmp.ne.s32.totalorder %s97, %s98
      %p110 = scmp.eq.s32.totalorder %s18, 1
      %p111 = por %p109, %p110
      %p113 = scmp.ne.s32.totalorder %s98, %s112
      %p114 = scmp.eq.s32.totalorder %s18, 0
      %p115 = por %p113, %p114
      %s116 = ssub.s32 %s19, %s38
      %s117 = ssub.s32 %s20, %s34
      %s118 = sor.u32 %s116, %s117
      %p119 = scmp.eq.s32.totalorder %s118, 0
      %s121 = sadd.s32 %s120, 1
      %s122 = scalar_select %p119, %s120, %s121
      %p125 = pneg %p119
      %p126 = scmp.eq.s32.totalorder %s12, 1
      %p127 = por %p125, %p126
      %p128 = scmp.ne.s32.totalorder %s120, %s123
      %p129 = scmp.eq.s32.totalorder %s12, 0
      %p130 = por %p128, %p129
      %p131 = scmp.ne.s32.totalorder %s120, %s123
      %p132 = scmp.eq.s32.totalorder %s17, 1
      %p133 = por %p131, %p132
      %p134 = scmp.ne.s32.totalorder %s123, %s124
      %p135 = scmp.eq.s32.totalorder %s17, 0
      %p136 = por %p134, %p135
      %p137 = scmp.ne.s32.totalorder %s123, %s124
      %p138 = scmp.eq.s32.totalorder %s18, 1
      %p139 = por %p137, %p138
      %p141 = scmp.ne.s32.totalorder %s124, %s140
      %p142 = scmp.eq.s32.totalorder %s18, 0
      %p143 = por %p141, %p142
      %p144 = scmp.le.s32.totalorder 1, %s12
      %p145 = scmp.lt.s32.totalorder %s12, 3
      %p146 = pnand %p144, %p145
      %p147 = pneg %p146
      // Predicated region
      $region9: #{attention_forward.3} parent=5 // pred_check
        _
      $region10: #{attention_forward.3} parent=5 // pred_check_branch
        %149 = sbr.rel (%p146) target = $region12
      $region11: #{attention_forward.3} parent=5 // pred_region
        %s150 = ssub.s32 %s12, 1
        // Predicated region
        $region13: #{attention_forward.3} parent=11 // pred_check
          %p151 = pneg %p108
        $region14: #{attention_forward.3} parent=11 // pred_check_branch
          %153 = sbr.rel (%p151) target = $region16
        $region15: #{attention_forward.3} parent=11 // pred_region
          _
        $region16: #{attention_forward.3} parent=11 // pred_fallthru
          _
      $region12: #{attention_forward.3} parent=5 // pred_fallthru
        _
      %p154 = scmp.lt.s32.totalorder %s12, 2
      // Predicated region
      $region17: #{attention_forward.3} parent=5 // pred_check
        %p155 = pneg %p154
      $region18: #{attention_forward.3} parent=5 // pred_check_branch
        %157 = sbr.rel (%p155) target = $region20
      $region19: #{attention_forward.3} parent=5 // pred_region
        // Predicated region
        $region21: #{attention_forward.3} parent=19 // pred_check
          %p158 = pneg %p53
        $region22: #{attention_forward.3} parent=19 // pred_check_branch
          %160 = sbr.rel (%p158) target = $region24
        $region23: #{attention_forward.3} parent=19 // pred_region
          %s161 = smul.u32 2, %s20
          %p162 = scmp.lt.s32.totalorder %s19, 1
          %s163 = scalar_select %p162, %s19, 1
          %p164 = scmp.lt.s32.totalorder %s161, 1
          %s165 = scalar_select %p164, %s161, 1
          %s166 = smul.addr %s163, 4
          %s167 = sadd.s32 %s165, %s166
          %s168 = smul.addr %s167, 8
          %s169 = scalar_lea.vmem %s0, %s168
          %s170 = smul.u32 2, %s20
        $region24: #{attention_forward.3} parent=19 // pred_fallthru
          _
        // Predicated region
        $region25: #{attention_forward.3} parent=19 // pred_check
          %p171 = pneg %p81
        $region26: #{attention_forward.3} parent=19 // pred_check_branch
          %173 = sbr.rel (%p171) target = $region28
        $region27: #{attention_forward.3} parent=19 // pred_region
          %s174 = smul.u32 2, %s21
          %p175 = scmp.lt.s32.totalorder %s19, 1
          %s176 = scalar_select %p175, %s19, 1
          %p177 = scmp.lt.s32.totalorder %s174, 1
          %s178 = scalar_select %p177, %s174, 1
          %s179 = smul.addr %s176, 4
          %s180 = sadd.s32 %s178, %s179
          %s181 = smul.addr %s180, 8
          %s182 = scalar_lea.vmem %s1, %s181
          %s183 = smul.u32 2, %s21
        $region28: #{attention_forward.3} parent=19 // pred_fallthru
          _
      $region20: #{attention_forward.3} parent=5 // pred_fallthru
        _
      %p184 = scmp.le.s32.totalorder 1, %s12
      %p185 = scmp.lt.s32.totalorder %s12, 3
      %p186 = pnand %p184, %p185
      %p187 = pneg %p186
      // Predicated region
      $region29: #{attention_forward.3} parent=5 // pred_check
        _
      $region30: #{attention_forward.3} parent=5 // pred_check_branch
        %189 = sbr.rel (%p186) target = $region32
      $region31: #{attention_forward.3} parent=5 // pred_region
        %s190 = ssub.s32 %s12, 1
        %s191 = smul.u32 2, %s23
        %p192 = scmp.lt.s32.totalorder %s22, 1
        %s193 = scalar_select %p192, %s22, 1
        %p194 = scmp.lt.s32.totalorder %s191, 1
        %s195 = scalar_select %p194, %s191, 1
        %s196 = smul.addr %s193, 4
        %s197 = sadd.s32 %s195, %s196
        %s198 = smul.addr %s197, 8
        %s199 = scalar_lea.vmem %s0, %s198
        %p200 = pneg %p59
        %p201 = pneg %p56
        %s202 = smul.u32 2, %s24
        %p203 = scmp.lt.s32.totalorder %s22, 1
        %s204 = scalar_select %p203, %s22, 1
        %p205 = scmp.lt.s32.totalorder %s202, 1
        %s206 = scalar_select %p205, %s202, 1
        %s207 = smul.addr %s204, 4
        %s208 = sadd.s32 %s206, %s207
        %s209 = smul.addr %s208, 8
        %s210 = scalar_lea.vmem %s1, %s209
        %p211 = pneg %p87
        %p212 = pneg %p84
        %p213 = pneg %p108
        %p214 = pneg %p105
        %p215 = pneg %p136
        %p216 = pneg %p133
        %s217 = sand.u32 %s123, 1
        %s218 = scalar_lea.sflag [#allocation7], %s217
        %s219 = sand.u32 %s123, 1
        %s220 = smul.addr %s219, 16
        %s221 = scalar_lea.vmem [#allocation6], %s220
        %s222 = smul.u32 2, %s23
        %p223 = scmp.lt.s32.totalorder %s22, 1
        %s224 = scalar_select %p223, %s22, 1
        %p225 = scmp.lt.s32.totalorder %s222, 1
        %s226 = scalar_select %p225, %s222, 1
        %s227 = smul.addr %s224, 4
        %s228 = sadd.s32 %s226, %s227
        %s229 = smul.addr %s228, 8
        %s230 = scalar_lea.vmem %s0, %s229
        %s231 = smul.u32 2, %s23
        %s232 = smul.u32 2, %s24
        %p233 = scmp.lt.s32.totalorder %s22, 1
        %s234 = scalar_select %p233, %s22, 1
        %p235 = scmp.lt.s32.totalorder %s232, 1
        %s236 = scalar_select %p235, %s232, 1
        %s237 = smul.addr %s234, 4
        %s238 = sadd.s32 %s236, %s237
        %s239 = smul.addr %s238, 8
        %s240 = scalar_lea.vmem %s1, %s239
        %s241 = smul.u32 2, %s24
        %s242 = smul.u32 2, %s23
        %p243 = scmp.eq.s32.totalorder %s24, 0
        // Predicated region
        $region33: #{attention_forward.3} parent=31 // pred_check
          %p244 = pneg %p243
        $region34: #{attention_forward.3} parent=31 // pred_check_branch
          %246 = sbr.rel (%p244) target = $region36
        $region35: #{attention_forward.3} parent=31 // pred_region
          %vm247 = vcmask 7168
          %248 = vst.msk [vmem:[#allocation2] sm:$0xff] %vm247, -inf
          %249 = vst.msk [vmem:[#allocation2 + $0x8] sm:$0xff] %vm247, -inf
          %250 = vst.msk [vmem:[#allocation2 + $0x10] sm:$0xff] %vm247, -inf
          %251 = vst.msk [vmem:[#allocation2 + $0x18] sm:$0xff] %vm247, -inf
          %252 = vst.msk [vmem:[#allocation3] sm:$0xff] %vm247, 0.0
          %253 = vst.msk [vmem:[#allocation3 + $0x8] sm:$0xff] %vm247, 0.0
          %254 = vst.msk [vmem:[#allocation3 + $0x10] sm:$0xff] %vm247, 0.0
          %255 = vst.msk [vmem:[#allocation3 + $0x18] sm:$0xff] %vm247, 0.0
          %vm256 = vcmask 523264
          %257 = vst.msk [vmem:[#allocation4] sm:$0xff] %vm256, 0.0
          %258 = vst.msk [vmem:[#allocation4 + $0x8] sm:$0xff] %vm256, 0.0
          %259 = vst.msk [vmem:[#allocation4 + $0x10] sm:$0xff] %vm256, 0.0
          %260 = vst.msk [vmem:[#allocation4 + $0x18] sm:$0xff] %vm256, 0.0
        $region36: #{attention_forward.3} parent=31 // pred_fallthru
          _
        %v261 = vld [vmem:[%s230] sm:$0xff]
        %v262 = vld [vmem:[%s230 + $0x8] sm:$0xff]
        %v263 = vld [vmem:[%s230 + $0x10] sm:$0xff]
        %v264 = vld [vmem:[%s230 + $0x18] sm:$0xff]
        %v265 = vld [vmem:[%s240] sm:$0xff]
        %v266 = vld [vmem:[%s240 + $0x8] sm:$0xff]
        %v267 = vld [vmem:[%s240 + $0x10] sm:$0xff]
        %v268 = vld [vmem:[%s240 + $0x18] sm:$0xff]
        %vm269 = vcmask 523264
        %v271 = vsel %vm269, %v261, 0
        %v274 = vsel %vm269, %v262, 0
        %v277 = vsel %vm269, %v265, 0
        %v280 = vsel %vm269, %v266, 0
        %282 = vmatprep.subr.mxu0 0.0
        %283 = vmatpush1.xpose.msra.mxu0 %v277
        %284 = vmatprep.subr.mxu0 0.0
        %285 = vmatpush1.xpose.msra.mxu0 %v280
        %286 = vmatprep.subr.mxu0 0.0
        %287 = vmatpush1.xpose.msra.mxu0 0.0
        %288 = vmatprep.subr.mxu0 0.0
        %289 = vmatpush1.xpose.msra.mxu0 0.0
        %290 = vmatprep.subr.mxu0 0.0
        %291 = vmatpush1.xpose.msra.mxu0 0.0
        %292 = vmatprep.subr.mxu0 0.0
        %293 = vmatpush1.xpose.msra.mxu0 0.0
        %294 = vmatprep.subr.mxu0 0.0
        %295 = vmatpush1.xpose.msra.mxu0 0.0
        %296 = vmatprep.subr.mxu0 0.0
        %297 = vmatpush1.xpose.msra.mxu0 0.0
        %298 = vmatprep.subr.mxu0 0.0
        %299 = vmatpush1.xpose.msra.mxu0 0.0
        %300 = vmatprep.subr.mxu0 0.0
        %301 = vmatpush1.xpose.msra.mxu0 0.0
        %302 = vmatprep.subr.mxu0 0.0
        %303 = vmatpush1.xpose.msra.mxu0 0.0
        %304 = vmatprep.subr.mxu0 0.0
        %305 = vmatpush1.xpose.msra.mxu0 0.0
        %306 = vmatprep.subr.mxu0 0.0
        %307 = vmatpush1.xpose.msra.mxu0 0.0
        %308 = vmatprep.subr.mxu0 0.0
        %309 = vmatpush1.xpose.msra.mxu0 0.0
        %310 = vmatprep.subr.mxu0 0.0
        %311 = vmatpush1.xpose.msra.mxu0 0.0
        %312 = vmatprep.subr.mxu0 0.0
        %313 = vmatpush1.xpose.msra.mxu0 0.0
        %314 = vmatprep.subr.mxu0 0.0
        %315 = vmatpush1.xpose.msra.mxu0 0.0
        %316 = vmatprep.subr.mxu0 0.0
        %317 = vmatpush1.xpose.msra.mxu0 0.0
        %318 = vmatprep.subr.mxu0 0.0
        %319 = vmatpush1.xpose.msra.mxu0 0.0
        %320 = vmatprep.subr.mxu0 0.0
        %321 = vmatpush1.xpose.msra.mxu0 0.0
        %322 = vmatprep.subr.mxu0 0.0
        %323 = vmatpush1.xpose.msra.mxu0 0.0
        %324 = vmatprep.subr.mxu0 0.0
        %325 = vmatpush1.xpose.msra.mxu0 0.0
        %326 = vmatprep.subr.mxu0 0.0
        %327 = vmatpush1.xpose.msra.mxu0 0.0
        %328 = vmatprep.subr.mxu0 0.0
        %329 = vmatpush1.xpose.msra.mxu0 0.0
        %330 = vmatprep.subr.mxu0 0.0
        %331 = vmatpush1.xpose.msra.mxu0 0.0
        %332 = vmatprep.subr.mxu0 0.0
        %333 = vmatpush1.xpose.msra.mxu0 0.0
        %334 = vmatprep.subr.mxu0 0.0
        %335 = vmatpush1.xpose.msra.mxu0 0.0
        %336 = vmatprep.subr.mxu0 0.0
        %337 = vmatpush1.xpose.msra.mxu0 0.0
        %338 = vmatprep.subr.mxu0 0.0
        %339 = vmatpush1.xpose.msra.mxu0 0.0
        %340 = vmatprep.subr.mxu0 0.0
        %341 = vmatpush1.xpose.msra.mxu0 0.0
        %342 = vmatprep.subr.mxu0 0.0
        %343 = vmatpush1.xpose.msra.mxu0 0.0
        %344 = vmatprep.subr.mxu0 0.0
        %345 = vmatpush1.xpose.msra.mxu0 0.0
        %346 = vmatprep.mubr.f32.mxu0 0.0
        %347 = vmatmul.mubr.f32.gmra.mrb[0].mxu0 %v271
        %v348 = vpop.f32.mrb[0].mxu0
        %v349 = vadd.f32 0.0, %v348
        %v350 = vpop.f32.mrb[0].mxu0
        %351 = vmatprep.mubr.f32.mxu0 0.0
        %352 = vmatmul.mubr.f32.gmra.mrb[0].mxu0 %v274
        %v353 = vpop.f32.mrb[0].mxu0
        %v354 = vadd.f32 0.0, %v353
        %v355 = vpop.f32.mrb[0].mxu0
        %356 = vdwg.mxu0
        %v358 = vsel %vm269, %v263, 0
        %v361 = vsel %vm269, %v264, 0
        %v364 = vsel %vm269, %v267, 0
        %v367 = vsel %vm269, %v268, 0
        %369 = vmatprep.subr.mxu0 0.0
        %370 = vmatpush1.xpose.msra.mxu0 %v364
        %371 = vmatprep.subr.mxu0 0.0
        %372 = vmatpush1.xpose.msra.mxu0 %v367
        %373 = vmatprep.subr.mxu0 0.0
        %374 = vmatpush1.xpose.msra.mxu0 0.0
        %375 = vmatprep.subr.mxu0 0.0
        %376 = vmatpush1.xpose.msra.mxu0 0.0
        %377 = vmatprep.subr.mxu0 0.0
        %378 = vmatpush1.xpose.msra.mxu0 0.0
        %379 = vmatprep.subr.mxu0 0.0
        %380 = vmatpush1.xpose.msra.mxu0 0.0
        %381 = vmatprep.subr.mxu0 0.0
        %382 = vmatpush1.xpose.msra.mxu0 0.0
        %383 = vmatprep.subr.mxu0 0.0
        %384 = vmatpush1.xpose.msra.mxu0 0.0
        %385 = vmatprep.subr.mxu0 0.0
        %386 = vmatpush1.xpose.msra.mxu0 0.0
        %387 = vmatprep.subr.mxu0 0.0
        %388 = vmatpush1.xpose.msra.mxu0 0.0
        %389 = vmatprep.subr.mxu0 0.0
        %390 = vmatpush1.xpose.msra.mxu0 0.0
        %391 = vmatprep.subr.mxu0 0.0
        %392 = vmatpush1.xpose.msra.mxu0 0.0
        %393 = vmatprep.subr.mxu0 0.0
        %394 = vmatpush1.xpose.msra.mxu0 0.0
        %395 = vmatprep.subr.mxu0 0.0
        %396 = vmatpush1.xpose.msra.mxu0 0.0
        %397 = vmatprep.subr.mxu0 0.0
        %398 = vmatpush1.xpose.msra.mxu0 0.0
        %399 = vmatprep.subr.mxu0 0.0
        %400 = vmatpush1.xpose.msra.mxu0 0.0
        %401 = vmatprep.subr.mxu0 0.0
        %402 = vmatpush1.xpose.msra.mxu0 0.0
        %403 = vmatprep.subr.mxu0 0.0
        %404 = vmatpush1.xpose.msra.mxu0 0.0
        %405 = vmatprep.subr.mxu0 0.0
        %406 = vmatpush1.xpose.msra.mxu0 0.0
        %407 = vmatprep.subr.mxu0 0.0
        %408 = vmatpush1.xpose.msra.mxu0 0.0
        %409 = vmatprep.subr.mxu0 0.0
        %410 = vmatpush1.xpose.msra.mxu0 0.0
        %411 = vmatprep.subr.mxu0 0.0
        %412 = vmatpush1.xpose.msra.mxu0 0.0
        %413 = vmatprep.subr.mxu0 0.0
        %414 = vmatpush1.xpose.msra.mxu0 0.0
        %415 = vmatprep.subr.mxu0 0.0
        %416 = vmatpush1.xpose.msra.mxu0 0.0
        %417 = vmatprep.subr.mxu0 0.0
        %418 = vmatpush1.xpose.msra.mxu0 0.0
        %419 = vmatprep.subr.mxu0 0.0
        %420 = vmatpush1.xpose.msra.mxu0 0.0
        %421 = vmatprep.subr.mxu0 0.0
        %422 = vmatpush1.xpose.msra.mxu0 0.0
        %423 = vmatprep.subr.mxu0 0.0
        %424 = vmatpush1.xpose.msra.mxu0 0.0
        %425 = vmatprep.subr.mxu0 0.0
        %426 = vmatpush1.xpose.msra.mxu0 0.0
        %427 = vmatprep.subr.mxu0 0.0
        %428 = vmatpush1.xpose.msra.mxu0 0.0
        %429 = vmatprep.subr.mxu0 0.0
        %430 = vmatpush1.xpose.msra.mxu0 0.0
        %431 = vmatprep.subr.mxu0 0.0
        %432 = vmatpush1.xpose.msra.mxu0 0.0
        %433 = vmatprep.mubr.f32.mxu0 0.0
        %434 = vmatmul.mubr.f32.gmra.mrb[0].mxu0 %v358
        %v435 = vpop.f32.mrb[0].mxu0
        %v436 = vadd.f32 0.0, %v435
        %v437 = vpop.f32.mrb[0].mxu0
        %438 = vmatprep.mubr.f32.mxu0 0.0
        %439 = vmatmul.mubr.f32.gmra.mrb[0].mxu0 %v361
        %v440 = vpop.f32.mrb[0].mxu0
        %v441 = vadd.f32 0.0, %v440
        %v442 = vpop.f32.mrb[0].mxu0
        %443 = vdwg.mxu0
        %v444 = vld [vmem:[#allocation2] sm:$0xff]
        %v445 = vld [vmem:[#allocation2 + $0x8] sm:$0xff]
        %v446 = vld [vmem:[#allocation2 + $0x10] sm:$0xff]
        %v447 = vld [vmem:[#allocation2 + $0x18] sm:$0xff]
        %vm448 = vcmask 130048
        %v449 = vsel %vm448, %v349, -inf
        %450 = vmax.xlane.f32.xlu0 %v449
        %v451 = vpop.xlane.xlu0 %450
        %v452 = vsel %vm448, %v354, -inf
        %453 = vmax.xlane.f32.xlu0 %v452
        %v454 = vpop.xlane.xlu0 %453
        %v455 = vsel %vm448, %v436, -inf
        %456 = vmax.xlane.f32.xlu0 %v455
        %v457 = vpop.xlane.xlu0 %456
        %v458 = vsel %vm448, %v441, -inf
        %459 = vmax.xlane.f32.xlu0 %v458
        %v460 = vpop.xlane.xlu0 %459
        %v461 = vmax.f32 %v444, %v451
        %v462 = vmax.f32 %v445, %v454
        %v463 = vmax.f32 %v446, %v457
        %v464 = vmax.f32 %v447, %v460
        %v465 = vsub.f32 %v444, %v461
        %v466 = vsub.f32 %v445, %v462
        %v467 = vsub.f32 %v446, %v463
        %v468 = vsub.f32 %v447, %v464
        %v469 = vmul.f32 %v465, 1.442695
        %v470 = vpow.pop %v469
        %v471 = vmul.f32 %v466, 1.442695
        %v472 = vpow.pop %v471
        %v473 = vmul.f32 %v467, 1.442695
        %v474 = vpow.pop %v473
        %v475 = vmul.f32 %v468, 1.442695
        %v476 = vpow.pop %v475
        %478 = vset.pattern.permute.xlu0 0
        %479 = vperm.xlu0 %478, %v461
        %v480 = vpop.permute.xlu0 %479
        %483 = vset.pattern.permute.xlu0 0
        %484 = vperm.xlu0 %483, %v462
        %v485 = vpop.permute.xlu0 %484
        %488 = vset.pattern.permute.xlu0 0
        %489 = vperm.xlu0 %488, %v463
        %v490 = vpop.permute.xlu0 %489
        %493 = vset.pattern.permute.xlu0 0
        %494 = vperm.xlu0 %493, %v464
        %v495 = vpop.permute.xlu0 %494
        %v497 = vsub.f32 %v349, %v480
        %v498 = vsub.f32 %v354, %v485
        %v499 = vsub.f32 %v436, %v490
        %v500 = vsub.f32 %v441, %v495
        %v501 = vmul.f32 %v497, 1.442695
        %v502 = vpow.pop %v501
        %v503 = vmul.f32 %v498, 1.442695
        %v504 = vpow.pop %v503
        %v505 = vmul.f32 %v499, 1.442695
        %v506 = vpow.pop %v505
        %v507 = vmul.f32 %v500, 1.442695
        %v508 = vpow.pop %v507
        %v509 = vld [vmem:[#allocation3] sm:$0xff]
        %v510 = vld [vmem:[#allocation3 + $0x8] sm:$0xff]
        %v511 = vld [vmem:[#allocation3 + $0x10] sm:$0xff]
        %v512 = vld [vmem:[#allocation3 + $0x18] sm:$0xff]
        %v513 = vmul.f32 %v470, %v509
        %v514 = vmul.f32 %v472, %v510
        %v515 = vmul.f32 %v474, %v511
        %v516 = vmul.f32 %v476, %v512
        %v517 = vsel %vm448, %v502, 0.0
        %518 = vadd.xlane.f32.xlu0 %v517
        %v519 = vpop.xlane.xlu0 %518
        %v520 = vsel %vm448, %v504, 0.0
        %521 = vadd.xlane.f32.xlu0 %v520
        %v522 = vpop.xlane.xlu0 %521
        %v523 = vsel %vm448, %v506, 0.0
        %524 = vadd.xlane.f32.xlu0 %v523
        %v525 = vpop.xlane.xlu0 %524
        %v526 = vsel %vm448, %v508, 0.0
        %527 = vadd.xlane.f32.xlu0 %v526
        %v528 = vpop.xlane.xlu0 %527
        %v529 = vadd.f32 %v513, %v519
        %v530 = vadd.f32 %v514, %v522
        %v531 = vadd.f32 %v515, %v525
        %v532 = vadd.f32 %v516, %v528
        %vm533 = vcmask 7168
        %534 = vst.msk [vmem:[#allocation3] sm:$0xff] %vm533, %v529
        %535 = vst.msk [vmem:[#allocation3 + $0x8] sm:$0xff] %vm533, %v530
        %536 = vst.msk [vmem:[#allocation3 + $0x10] sm:$0xff] %vm533, %v531
        %537 = vst.msk [vmem:[#allocation3 + $0x18] sm:$0xff] %vm533, %v532
        %v538 = vld [vmem:[#allocation4] sm:$0xff]
        %v539 = vld [vmem:[#allocation4 + $0x8] sm:$0xff]
        %v540 = vld [vmem:[#allocation4 + $0x10] sm:$0xff]
        %v541 = vld [vmem:[#allocation4 + $0x18] sm:$0xff]
        %543 = vset.pattern.permute.xlu0 0
        %544 = vperm.xlu0 %543, %v470
        %v545 = vpop.permute.xlu0 %544
        %548 = vset.pattern.permute.xlu0 0
        %549 = vperm.xlu0 %548, %v472
        %v550 = vpop.permute.xlu0 %549
        %553 = vset.pattern.permute.xlu0 0
        %554 = vperm.xlu0 %553, %v474
        %v555 = vpop.permute.xlu0 %554
        %558 = vset.pattern.permute.xlu0 0
        %559 = vperm.xlu0 %558, %v476
        %v560 = vpop.permute.xlu0 %559
        %v562 = vmul.f32 %v545, %v538
        %v563 = vmul.f32 %v550, %v539
        %v564 = vmul.f32 %v555, %v540
        %v565 = vmul.f32 %v560, %v541
        %566 = vrot.lane.b32.xlu0 %v265, 64
        %v567 = vpop.permute.xlu0 %566
        %568 = vrot.lane.b32.xlu0 %v266, 64
        %v569 = vpop.permute.xlu0 %568
        %v573 = vsel %vm448, %v502, 0
        %v576 = vsel %vm448, %v504, 0
        %578 = vmatprep.subr.mxu0 0.0
        %579 = vmatpush1.msra.mxu0 %v567
        %580 = vmatprep.subr.mxu0 0.0
        %581 = vmatpush1.msra.mxu0 %v569
        %582 = vmatprep.subr.mxu0 0.0
        %583 = vmatpush1.msra.mxu0 0.0
        %584 = vmatprep.subr.mxu0 0.0
        %585 = vmatpush1.msra.mxu0 0.0
        %586 = vmatprep.subr.mxu0 0.0
        %587 = vmatpush1.msra.mxu0 0.0
        %588 = vmatprep.subr.mxu0 0.0
        %589 = vmatpush1.msra.mxu0 0.0
        %590 = vmatprep.subr.mxu0 0.0
        %591 = vmatpush1.msra.mxu0 0.0
        %592 = vmatprep.subr.mxu0 0.0
        %593 = vmatpush1.msra.mxu0 0.0
        %594 = vmatprep.subr.mxu0 0.0
        %595 = vmatpush1.msra.mxu0 0.0
        %596 = vmatprep.subr.mxu0 0.0
        %597 = vmatpush1.msra.mxu0 0.0
        %598 = vmatprep.subr.mxu0 0.0
        %599 = vmatpush1.msra.mxu0 0.0
        %600 = vmatprep.subr.mxu0 0.0
        %601 = vmatpush1.msra.mxu0 0.0
        %602 = vmatprep.subr.mxu0 0.0
        %603 = vmatpush1.msra.mxu0 0.0
        %604 = vmatprep.subr.mxu0 0.0
        %605 = vmatpush1.msra.mxu0 0.0
        %606 = vmatprep.subr.mxu0 0.0
        %607 = vmatpush1.msra.mxu0 0.0
        %608 = vmatprep.subr.mxu0 0.0
        %609 = vmatpush1.msra.mxu0 0.0
        %610 = vmatprep.subr.mxu0 0.0
        %611 = vmatpush1.msra.mxu0 0.0
        %612 = vmatprep.subr.mxu0 0.0
        %613 = vmatpush1.msra.mxu0 0.0
        %614 = vmatprep.subr.mxu0 0.0
        %615 = vmatpush1.msra.mxu0 0.0
        %616 = vmatprep.subr.mxu0 0.0
        %617 = vmatpush1.msra.mxu0 0.0
        %618 = vmatprep.subr.mxu0 0.0
        %619 = vmatpush1.msra.mxu0 0.0
        %620 = vmatprep.subr.mxu0 0.0
        %621 = vmatpush1.msra.mxu0 0.0
        %622 = vmatprep.subr.mxu0 0.0
        %623 = vmatpush1.msra.mxu0 0.0
        %624 = vmatprep.subr.mxu0 0.0
        %625 = vmatpush1.msra.mxu0 0.0
        %626 = vmatprep.subr.mxu0 0.0
        %627 = vmatpush1.msra.mxu0 0.0
        %628 = vmatprep.subr.mxu0 0.0
        %629 = vmatpush1.msra.mxu0 0.0
        %630 = vmatprep.subr.mxu0 0.0
        %631 = vmatpush1.msra.mxu0 0.0
        %632 = vmatprep.subr.mxu0 0.0
        %633 = vmatpush1.msra.mxu0 0.0
        %634 = vmatprep.subr.mxu0 0.0
        %635 = vmatpush1.msra.mxu0 0.0
        %636 = vmatprep.subr.mxu0 0.0
        %637 = vmatpush1.msra.mxu0 0.0
        %638 = vmatprep.subr.mxu0 0.0
        %639 = vmatpush1.msra.mxu0 0.0
        %640 = vmatprep.subr.mxu0 0.0
        %641 = vmatpush1.msra.mxu0 0.0
        %642 = vmatprep.mubr.f32.mxu0 0.0
        %643 = vmatmul.mubr.f32.gmra.mrb[0].mxu0 %v573
        %v644 = vpop.f32.mrb[0].mxu0
        %v645 = vadd.f32 0.0, %v644
        %v646 = vpop.f32.mrb[0].mxu0
        %647 = vmatprep.mubr.f32.mxu0 0.0
        %648 = vmatmul.mubr.f32.gmra.mrb[0].mxu0 %v576
        %v649 = vpop.f32.mrb[0].mxu0
        %v650 = vadd.f32 0.0, %v649
        %v651 = vpop.f32.mrb[0].mxu0
        %652 = vdwg.mxu0
        %653 = vrot.lane.b32.xlu0 %v267, 64
        %v654 = vpop.permute.xlu0 %653
        %655 = vrot.lane.b32.xlu0 %v268, 64
        %v656 = vpop.permute.xlu0 %655
        %v660 = vsel %vm448, %v506, 0
        %v663 = vsel %vm448, %v508, 0
        %665 = vmatprep.subr.mxu0 0.0
        %666 = vmatpush1.msra.mxu0 %v654
        %667 = vmatprep.subr.mxu0 0.0
        %668 = vmatpush1.msra.mxu0 %v656
        %669 = vmatprep.subr.mxu0 0.0
        %670 = vmatpush1.msra.mxu0 0.0
        %671 = vmatprep.subr.mxu0 0.0
        %672 = vmatpush1.msra.mxu0 0.0
        %673 = vmatprep.subr.mxu0 0.0
        %674 = vmatpush1.msra.mxu0 0.0
        %675 = vmatprep.subr.mxu0 0.0
        %676 = vmatpush1.msra.mxu0 0.0
        %677 = vmatprep.subr.mxu0 0.0
        %678 = vmatpush1.msra.mxu0 0.0
        %679 = vmatprep.subr.mxu0 0.0
        %680 = vmatpush1.msra.mxu0 0.0
        %681 = vmatprep.subr.mxu0 0.0
        %682 = vmatpush1.msra.mxu0 0.0
        %683 = vmatprep.subr.mxu0 0.0
        %684 = vmatpush1.msra.mxu0 0.0
        %685 = vmatprep.subr.mxu0 0.0
        %686 = vmatpush1.msra.mxu0 0.0
        %687 = vmatprep.subr.mxu0 0.0
        %688 = vmatpush1.msra.mxu0 0.0
        %689 = vmatprep.subr.mxu0 0.0
        %690 = vmatpush1.msra.mxu0 0.0
        %691 = vmatprep.subr.mxu0 0.0
        %692 = vmatpush1.msra.mxu0 0.0
        %693 = vmatprep.subr.mxu0 0.0
        %694 = vmatpush1.msra.mxu0 0.0
        %695 = vmatprep.subr.mxu0 0.0
        %696 = vmatpush1.msra.mxu0 0.0
        %697 = vmatprep.subr.mxu0 0.0
        %698 = vmatpush1.msra.mxu0 0.0
        %699 = vmatprep.subr.mxu0 0.0
        %700 = vmatpush1.msra.mxu0 0.0
        %701 = vmatprep.subr.mxu0 0.0
        %702 = vmatpush1.msra.mxu0 0.0
        %703 = vmatprep.subr.mxu0 0.0
        %704 = vmatpush1.msra.mxu0 0.0
        %705 = vmatprep.subr.mxu0 0.0
        %706 = vmatpush1.msra.mxu0 0.0
        %707 = vmatprep.subr.mxu0 0.0
        %708 = vmatpush1.msra.mxu0 0.0
        %709 = vmatprep.subr.mxu0 0.0
        %710 = vmatpush1.msra.mxu0 0.0
        %711 = vmatprep.subr.mxu0 0.0
        %712 = vmatpush1.msra.mxu0 0.0
        %713 = vmatprep.subr.mxu0 0.0
        %714 = vmatpush1.msra.mxu0 0.0
        %715 = vmatprep.subr.mxu0 0.0
        %716 = vmatpush1.msra.mxu0 0.0
        %717 = vmatprep.subr.mxu0 0.0
        %718 = vmatpush1.msra.mxu0 0.0
        %719 = vmatprep.subr.mxu0 0.0
        %720 = vmatpush1.msra.mxu0 0.0
        %721 = vmatprep.subr.mxu0 0.0
        %722 = vmatpush1.msra.mxu0 0.0
        %723 = vmatprep.subr.mxu0 0.0
        %724 = vmatpush1.msra.mxu0 0.0
        %725 = vmatprep.subr.mxu0 0.0
        %726 = vmatpush1.msra.mxu0 0.0
        %727 = vmatprep.subr.mxu0 0.0
        %728 = vmatpush1.msra.mxu0 0.0
        %729 = vmatprep.mubr.f32.mxu0 0.0
        %730 = vmatmul.mubr.f32.gmra.mrb[0].mxu0 %v660
        %v731 = vpop.f32.mrb[0].mxu0
        %v732 = vadd.f32 0.0, %v731
        %v733 = vpop.f32.mrb[0].mxu0
        %734 = vmatprep.mubr.f32.mxu0 0.0
        %735 = vmatmul.mubr.f32.gmra.mrb[0].mxu0 %v663
        %v736 = vpop.f32.mrb[0].mxu0
        %v737 = vadd.f32 0.0, %v736
        %v738 = vpop.f32.mrb[0].mxu0
        %739 = vdwg.mxu0
        %v740 = vadd.f32 %v562, %v645
        %v741 = vadd.f32 %v563, %v650
        %v742 = vadd.f32 %v564, %v732
        %v743 = vadd.f32 %v565, %v737
        %744 = vst.msk [vmem:[#allocation4] sm:$0xff] %vm269, %v740
        %745 = vst.msk [vmem:[#allocation4 + $0x8] sm:$0xff] %vm269, %v741
        %746 = vst.msk [vmem:[#allocation4 + $0x10] sm:$0xff] %vm269, %v742
        %747 = vst.msk [vmem:[#allocation4 + $0x18] sm:$0xff] %vm269, %v743
        %748 = vst.msk [vmem:[#allocation2] sm:$0xff] %vm533, %v461
        %749 = vst.msk [vmem:[#allocation2 + $0x8] sm:$0xff] %vm533, %v462
        %750 = vst.msk [vmem:[#allocation2 + $0x10] sm:$0xff] %vm533, %v463
        %751 = vst.msk [vmem:[#allocation2 + $0x18] sm:$0xff] %vm533, %v464
        // Predicated region
        $region37: #{attention_forward.3} parent=31 // pred_check
          %p752 = pneg %p243
        $region38: #{attention_forward.3} parent=31 // pred_check_branch
          %754 = sbr.rel (%p752) target = $region40
        $region39: #{attention_forward.3} parent=31 // pred_region
          %v755 = vld [vmem:[#allocation3] sm:$0xff]
          %v756 = vld [vmem:[#allocation3 + $0x8] sm:$0xff]
          %v757 = vld [vmem:[#allocation3 + $0x10] sm:$0xff]
          %v758 = vld [vmem:[#allocation3 + $0x18] sm:$0xff]
          %v759 = vrcp.pop %v755
          %v760 = vrcp.pop %v756
          %v761 = vrcp.pop %v757
          %v762 = vrcp.pop %v758
          %v763 = vld [vmem:[#allocation4] sm:$0xff]
          %v764 = vld [vmem:[#allocation4 + $0x8] sm:$0xff]
          %v765 = vld [vmem:[#allocation4 + $0x10] sm:$0xff]
          %v766 = vld [vmem:[#allocation4 + $0x18] sm:$0xff]
          %768 = vset.pattern.permute.xlu0 0
          %769 = vperm.xlu0 %768, %v759
          %v770 = vpop.permute.xlu0 %769
          %773 = vset.pattern.permute.xlu0 0
          %774 = vperm.xlu0 %773, %v760
          %v775 = vpop.permute.xlu0 %774
          %778 = vset.pattern.permute.xlu0 0
          %779 = vperm.xlu0 %778, %v761
          %v780 = vpop.permute.xlu0 %779
          %783 = vset.pattern.permute.xlu0 0
          %784 = vperm.xlu0 %783, %v762
          %v785 = vpop.permute.xlu0 %784
          %v787 = vmul.f32 %v763, %v770
          %v788 = vmul.f32 %v764, %v775
          %v789 = vmul.f32 %v765, %v780
          %v790 = vmul.f32 %v766, %v785
          %791 = vst.msk [vmem:[#allocation5] sm:$0xff] %vm269, %v787
          %792 = vst.msk [vmem:[#allocation5 + $0x8] sm:$0xff] %vm269, %v788
          %795 = vrot.lane.b32.xlu0 %v789, 64
          %v796 = vpop.permute.xlu0 %795
          %797 = vrot.lane.b32.xlu0 %v790, 64
          %v798 = vpop.permute.xlu0 %797
          %vm801 = vcmask 1048064
          %802 = vst.msk [vmem:[#allocation5] sm:$0xff] %vm801, %v796
          %803 = vst.msk [vmem:[#allocation5 + $0x8] sm:$0xff] %vm801, %v798
          %v804 = vld [vmem:[#allocation5] sm:$0xff]
          %v805 = vld [vmem:[#allocation5 + $0x8] sm:$0xff]
          %v806 = vld [vmem:[%s2] sm:$0xff]
          %v807 = vld [vmem:[%s2 + $0x8] sm:$0xff]
          %v808 = vld [vmem:[%s2 + $0x10] sm:$0xff]
          %v809 = vld [vmem:[%s2 + $0x18] sm:$0xff]
          %v810 = vld [vmem:[%s2 + $0x20] sm:$0xff]
          %v811 = vld [vmem:[%s2 + $0x28] sm:$0xff]
          %v812 = vld [vmem:[%s2 + $0x30] sm:$0xff]
          %v813 = vld [vmem:[%s2 + $0x38] sm:$0xff]
          %v814 = vld [vmem:[%s2 + $0x40] sm:$0xff]
          %v815 = vld [vmem:[%s2 + $0x48] sm:$0xff]
          %v816 = vld [vmem:[%s2 + $0x50] sm:$0xff]
          %v817 = vld [vmem:[%s2 + $0x58] sm:$0xff]
          %v818 = vld [vmem:[%s2 + $0x60] sm:$0xff]
          %v819 = vld [vmem:[%s2 + $0x68] sm:$0xff]
          %v820 = vld [vmem:[%s2 + $0x70] sm:$0xff]
          %v821 = vld [vmem:[%s2 + $0x78] sm:$0xff]
          %822 = vmatprep.subr.mxu0 0.0
          %823 = vmatpush1.msra.mxu0 %v806
          %824 = vmatprep.subr.mxu0 0.0
          %825 = vmatpush1.msra.mxu0 %v807
          %826 = vmatprep.subr.mxu0 0.0
          %827 = vmatpush1.msra.mxu0 %v808
          %828 = vmatprep.subr.mxu0 0.0
          %829 = vmatpush1.msra.mxu0 %v809
          %830 = vmatprep.subr.mxu0 0.0
          %831 = vmatpush1.msra.mxu0 %v810
          %832 = vmatprep.subr.mxu0 0.0
          %833 = vmatpush1.msra.mxu0 %v811
          %834 = vmatprep.subr.mxu0 0.0
          %835 = vmatpush1.msra.mxu0 %v812
          %836 = vmatprep.subr.mxu0 0.0
          %837 = vmatpush1.msra.mxu0 %v813
          %838 = vmatprep.subr.mxu0 0.0
          %839 = vmatpush1.msra.mxu0 %v814
          %840 = vmatprep.subr.mxu0 0.0
          %841 = vmatpush1.msra.mxu0 %v815
          %842 = vmatprep.subr.mxu0 0.0
          %843 = vmatpush1.msra.mxu0 %v816
          %844 = vmatprep.subr.mxu0 0.0
          %845 = vmatpush1.msra.mxu0 %v817
          %846 = vmatprep.subr.mxu0 0.0
          %847 = vmatpush1.msra.mxu0 %v818
          %848 = vmatprep.subr.mxu0 0.0
          %849 = vmatpush1.msra.mxu0 %v819
          %850 = vmatprep.subr.mxu0 0.0
          %851 = vmatpush1.msra.mxu0 %v820
          %852 = vmatprep.subr.mxu0 0.0
          %853 = vmatpush1.msra.mxu0 %v821
          %854 = vmatprep.subr.mxu0 0.0
          %855 = vmatpush1.msra.mxu0 0.0
          %856 = vmatprep.subr.mxu0 0.0
          %857 = vmatpush1.msra.mxu0 0.0
          %858 = vmatprep.subr.mxu0 0.0
          %859 = vmatpush1.msra.mxu0 0.0
          %860 = vmatprep.subr.mxu0 0.0
          %861 = vmatpush1.msra.mxu0 0.0
          %862 = vmatprep.subr.mxu0 0.0
          %863 = vmatpush1.msra.mxu0 0.0
          %864 = vmatprep.subr.mxu0 0.0
          %865 = vmatpush1.msra.mxu0 0.0
          %866 = vmatprep.subr.mxu0 0.0
          %867 = vmatpush1.msra.mxu0 0.0
          %868 = vmatprep.subr.mxu0 0.0
          %869 = vmatpush1.msra.mxu0 0.0
          %870 = vmatprep.subr.mxu0 0.0
          %871 = vmatpush1.msra.mxu0 0.0
          %872 = vmatprep.subr.mxu0 0.0
          %873 = vmatpush1.msra.mxu0 0.0
          %874 = vmatprep.subr.mxu0 0.0
          %875 = vmatpush1.msra.mxu0 0.0
          %876 = vmatprep.subr.mxu0 0.0
          %877 = vmatpush1.msra.mxu0 0.0
          %878 = vmatprep.subr.mxu0 0.0
          %879 = vmatpush1.msra.mxu0 0.0
          %880 = vmatprep.subr.mxu0 0.0
          %881 = vmatpush1.msra.mxu0 0.0
          %882 = vmatprep.subr.mxu0 0.0
          %883 = vmatpush1.msra.mxu0 0.0
          %884 = vmatprep.subr.mxu0 0.0
          %885 = vmatpush1.msra.mxu0 0.0
          %886 = vmatprep.mubr.f32.mxu0 0.0
          %887 = vmatmul.mubr.f32.gmra.mrb[0].mxu0 %v804
          %v888 = vpop.f32.mrb[0].mxu0
          %v889 = vadd.f32 0.0, %v888
          %v890 = vpop.f32.mrb[0].mxu0
          %891 = vmatprep.mubr.f32.mxu0 0.0
          %892 = vmatmul.mubr.f32.gmra.mrb[0].mxu0 %v805
          %v893 = vpop.f32.mrb[0].mxu0
          %v894 = vadd.f32 0.0, %v893
          %v895 = vpop.f32.mrb[0].mxu0
          %896 = vdwg.mxu0
          %vm897 = vcmask 261120
          %898 = vst.msk [vmem:[%s221] sm:$0xff] %vm897, %v889
          %899 = vst.msk [vmem:[%s221 + $0x8] sm:$0xff] %vm897, %v894
        $region40: #{attention_forward.3} parent=31 // pred_fallthru
          _
        %s900 = sand.u32 %s123, 1
        %s901 = scalar_lea.sflag [#allocation7], %s900
        %s902 = sand.u32 %s123, 1
        %s903 = smul.addr %s902, 16
        %s904 = scalar_lea.vmem [#allocation6], %s903
        // Predicated region
        $region41: #{attention_forward.3} parent=31 // pred_check
          %p905 = pneg %p133
        $region42: #{attention_forward.3} parent=31 // pred_check_branch
          %907 = sbr.rel (%p905) target = $region44
        $region43: #{attention_forward.3} parent=31 // pred_region
          %s908 = smul.u32 2, %s23
          %s910 = ssub.s32 256, 256
          %911 = vsyncadd %s901, %s910
          %s912 = smul.addr %s22, 2
          %s913 = sadd.s32 %s908, %s912
          %s914 = smul.addr %s913, 128
          %s915 = scalar_lea.hbm %s3, %s914
          %s916 = sshll.u32 %s904, 4
          %s917 = int_to_ptr.vmem [resolvable:$true] %s916
          %922 = dma.vmem_to_hbm [thread:$0]  %s917, 256, %s915, %s901, 128, 128, 8
        $region44: #{attention_forward.3} parent=31 // pred_fallthru
          _
      $region32: #{attention_forward.3} parent=5 // pred_fallthru
        _
      %p923 = scmp.le.s32.totalorder 2, %s12
      // Predicated region
      $region45: #{attention_forward.3} parent=5 // pred_check
        %p924 = pneg %p923
      $region46: #{attention_forward.3} parent=5 // pred_check_branch
        %926 = sbr.rel (%p924) target = $region48
      $region47: #{attention_forward.3} parent=5 // pred_region
        %s927 = ssub.s32 %s12, 2
        // Predicated region
        $region49: #{attention_forward.3} parent=47 // pred_check
          %p928 = pneg %p139
        $region50: #{attention_forward.3} parent=47 // pred_check_branch
          %930 = sbr.rel (%p928) target = $region52
        $region51: #{attention_forward.3} parent=47 // pred_region
          %s931 = sand.u32 %s124, 1
          %s932 = scalar_lea.sflag [#allocation7], %s931
          %s933 = sand.u32 %s124, 1
          %s934 = smul.addr %s933, 16
          %s935 = scalar_lea.vmem [#allocation6], %s934
          %936 = dma.done %s932, 256
        $region52: #{attention_forward.3} parent=47 // pred_fallthru
          _
      $region48: #{attention_forward.3} parent=5 // pred_fallthru
        _
    $region6: #{attention_forward.3} parent=1 // loop_footer
      %s16 = sadd.s32 1, %s12
    $region7: #{attention_forward.3} parent=1 // loop_footer_branch
      %11 = sbr.rel target = $region3
    $region8: #{attention_forward.3} parent=1 // loop_exit
      _
    %937 = vsyncpa [#allocation7], 1
    %s938 = scalar_lea.sflag [#allocation7], 1
    %939 = vsyncpa %s938, 1

</llo_original>
